<compile_context>
chip_gen: v7x
topology: tpu7x:2x2x1
jax: 0.10.0
libtpu: 0.0.40
codegen_flags: <defaults>
</compile_context>

<pallas_src>
import math
import numpy as np

import jax
import jax.numpy as jnp
from jax.experimental import pallas as pl
from jax.experimental.pallas import tpu as pltpu

_EPS = 1e-5      # BatchNorm1d default eps
_SLOPE = 0.2     # LeakyReLU negative slope


# ----------------------------------------------------------------------------
# Host-side operator setup
# ----------------------------------------------------------------------------
def _upsample_matrix(l_in, scale):
    """U (l_in, l_out) with y[:, j] = sum_i x[:, i] * U[i, j]  ==
    nn.Upsample(scale_factor=scale, mode='linear', align_corners=False)."""
    l_out = int(math.floor(l_in * scale))
    j = np.arange(l_out, dtype=np.float64)
    src = (j + 0.5) * (float(l_in) / float(l_out)) - 0.5
    src = np.maximum(src, 0.0)
    i0 = np.minimum(np.floor(src).astype(np.int64), l_in - 1)
    i1 = np.minimum(i0 + 1, l_in - 1)
    lam1 = src - i0
    lam0 = 1.0 - lam1
    U = np.zeros((l_in, l_out), dtype=np.float64)
    U[i0, np.arange(l_out)] += lam0
    U[i1, np.arange(l_out)] += lam1
    return U


def _tap_weights(weight, groups):
    """weight: (Cout_total, Cin_per_group, 3) PyTorch Conv1d layout.
    Returns (3, Cout_total, Cin_total) dense tap matrices, block-diagonal over
    groups, so the conv is  acc = W[0]@x[j-1] + W[1]@x[j] + W[2]@x[j+1]."""
    w = np.asarray(weight, dtype=np.float32)
    cout_t, cin_pg, _ = w.shape
    cout_pg = cout_t // groups
    cin_t = cin_pg * groups
    W = np.zeros((3, cout_t, cin_t), dtype=np.float32)
    for g in range(groups):
        for k in range(3):
            W[k, g * cout_pg:(g + 1) * cout_pg, g * cin_pg:(g + 1) * cin_pg] = \
                w[g * cout_pg:(g + 1) * cout_pg, :, k]
    return W


def _pick_batch_tile(n):
    """Largest batch tile in {1,2,4,8} dividing n while keeping >=2 grid steps
    (so both TensorCores are fed on v7x)."""
    best = 1
    for bt in (2, 4, 8):
        if n % bt == 0 and n // bt >= 2:
            best = bt
    return best


def _vmem_limit_bytes():
    """Generation-aware scoped-VMEM budget: ~3/4 of physical VMEM, capped at
    100 MiB (v5e/v6e: 128 MiB physical, v7x: 64 MiB per TensorCore)."""
    cap = 64 * 1024 * 1024
    try:
        cap = int(pltpu.get_tpu_info().vmem_capacity_bytes)
    except Exception:
        pass
    return int(min(100 * 1024 * 1024, max(32 * 1024 * 1024, (cap * 3) // 4)))


# ----------------------------------------------------------------------------
# Pallas kernel (one grid step == one batch tile, layout is (C, L))
# ----------------------------------------------------------------------------
def _make_layer_kernel(apply_in_act, with_stats):
    """apply_in_act: fuse previous layer's BN affine + LeakyReLU(0.2) on input.
    with_stats:   emit per-step BatchNorm partial sum / sum-of-squares."""

    def kernel(*refs):
        if apply_in_act:
            x_ref, sc_ref, sh_ref, u_ref, w_ref, b_ref = refs[:6]
            out_refs = refs[6:]
        else:
            x_ref, u_ref, w_ref, b_ref = refs[:4]
            sc_ref = sh_ref = None
            out_refs = refs[4:]
        if with_stats:
            y_ref, sum_ref, ssq_ref = out_refs
        else:
            (y_ref,) = out_refs

        bt, cin, l_in = x_ref.shape
        l_out = u_ref.shape[1]
        cout = w_ref.shape[1]

        x = x_ref[...]                                      # (bt, cin, l_in) bf16
        if apply_in_act:
            # Previous layer's BatchNorm folded into a per-channel affine
            # (channels sit on sublanes) followed by LeakyReLU(0.2).
            xf = x.astype(jnp.float32) * sc_ref[...][None] + sh_ref[...][None]
            xf = jnp.where(xf >= 0, xf, _SLOPE * xf)
            x = xf.astype(jnp.bfloat16)

        # Linear upsample: fold the batch tile onto the sublane axis so a single
        # (bt*Cin, l_in) @ (l_in, l_out) MXU matmul serves the whole grid step.
        x2 = x.reshape(bt * cin, l_in)
        xs = jnp.dot(x2, u_ref[...], preferred_element_type=jnp.float32)
        xs = xs.astype(jnp.bfloat16)                        # (bt*cin, l_out)

        # Conv1d(k=3, pad=1) taps: lane shift-by-one with an explicit zero
        # boundary column (no iota masks, no negative-shift roll).
        zcol = jnp.zeros((bt * cin, 1), jnp.bfloat16)
        xs_m1 = jnp.concatenate([zcol, xs[:, :l_out - 1]], axis=1)   # x_up[j-1]
        xs_p1 = jnp.concatenate([xs[:, 1:], zcol], axis=1)           # x_up[j+1]

        xs_c = xs.reshape(bt, cin, l_out)
        xs_m = xs_m1.reshape(bt, cin, l_out)
        xs_p = xs_p1.reshape(bt, cin, l_out)

        w = w_ref[...]                                      # (3, cout, cin) bf16
        w0, w1, w2 = w[0], w[1], w[2]
        bias = b_ref[...]                                   # (cout, 1) f32

        if with_stats:
            tot_s = jnp.zeros((cout, 1), jnp.float32)
            tot_q = jnp.zeros((cout, 1), jnp.float32)

        for b in range(bt):                                 # static unroll
            # Three tap-accumulated dots (MXU only, no lane concat / relayout).
            acc = jnp.dot(w0, xs_m[b], preferred_element_type=jnp.float32)
            acc = acc + jnp.dot(w1, xs_c[b], preferred_element_type=jnp.float32)
            acc = acc + jnp.dot(w2, xs_p[b], preferred_element_type=jnp.float32)
            acc = acc + bias                                # (cout, l_out) f32
            y_ref[b] = acc.astype(y_ref.dtype)              # lane-dense store
            if with_stats:
                # One-pass per-batch BatchNorm partial statistics (f32).
                # NOTE: var = E[x^2] - mean^2 can cancel if |mean| >> std; fine
                # for random-init weights, use a shifted/Welford scheme for
                # trained weights.
                tot_s = tot_s + jnp.sum(acc, axis=1, keepdims=True)
                tot_q = tot_q + jnp.sum(acc * acc, axis=1, keepdims=True)

        if with_stats:
            sum_ref[0] = tot_s
            ssq_ref[0] = tot_q

    return kernel


def _run_layer(x, u, w_taps, bias, in_scale, in_shift, *,
               with_stats, out_dtype, vmem_limit):
    """x: (N, Cin, l_in) bf16.  Returns (y, [bsum, bssq]), y (N, Cout, l_out)."""
    n, cin, l_in = x.shape
    l_out = u.shape[1]
    cout = w_taps.shape[1]
    bt = _pick_batch_tile(n)
    grid = n // bt
    apply_in_act = in_scale is not None

    inputs = [x]
    in_specs = [pl.BlockSpec((bt, cin, l_in), lambda i: (i, 0, 0))]
    if apply_in_act:
        inputs += [in_scale, in_shift]
        in_specs += [pl.BlockSpec((cin, 1), lambda i: (0, 0)),
                     pl.BlockSpec((cin, 1), lambda i: (0, 0))]
    inputs += [u, w_taps, bias]
    in_specs += [pl.BlockSpec((l_in, l_out), lambda i: (0, 0)),
                 pl.BlockSpec((3, cout, cin), lambda i: (0, 0, 0)),
                 pl.BlockSpec((cout, 1), lambda i: (0, 0))]

    out_shape = [jax.ShapeDtypeStruct((n, cout, l_out), out_dtype)]
    out_specs = [pl.BlockSpec((bt, cout, l_out), lambda i: (i, 0, 0))]
    if with_stats:
        out_shape += [jax.ShapeDtypeStruct((grid, cout, 1), jnp.float32),
                      jax.ShapeDtypeStruct((grid, cout, 1), jnp.float32)]
        out_specs += [pl.BlockSpec((1, cout, 1), lambda i: (i, 0, 0)),
                      pl.BlockSpec((1, cout, 1), lambda i: (i, 0, 0))]

    return pl.pallas_call(
        _make_layer_kernel(apply_in_act, with_stats),
        grid=(grid,),
        in_specs=in_specs,
        out_specs=tuple(out_specs),
        out_shape=tuple(out_shape),
        compiler_params=pltpu.CompilerParams(
            dimension_semantics=("parallel",),
            vmem_limit_bytes=vmem_limit),
    )(*inputs)


# ----------------------------------------------------------------------------
# Module wrapper
# ----------------------------------------------------------------------------
class DeconvEstimatorPallas:
    """Pallas equivalent of DeconvEstimator(in_channels, out_channels_list,
    groups, scale_factor).  Parameters initialized deterministically."""

    def __init__(self, in_channels, out_channels_list, groups, scale_factor, key):
        channels = [in_channels] + list(out_channels_list)
        self.groups = groups
        self.scale = scale_factor
        self.layer_params = []   # (kind, conv_w, conv_b, gamma, beta) for the reference
        self.layers_proc = []    # cached kernel operands
        self._vmem_limit = _vmem_limit_bytes()

        specs = [(channels[i], channels[i + 1], "block") for i in range(len(channels) - 1)]
        specs.append((channels[-1], 1, "final"))
        for cin_pg, cout_pg, kind in specs:
            key, wk, bk = jax.random.split(key, 3)
            bound = 1.0 / math.sqrt(cin_pg * 3)
            w = jax.random.uniform(wk, (cout_pg * groups, cin_pg, 3),
                                   jnp.float32, -bound, bound)
            b = jax.random.uniform(bk, (cout_pg * groups,), jnp.float32, -bound, bound)
            w_np, b_np = np.asarray(w), np.asarray(b)
            if kind == "block":
                gamma = np.ones((cout_pg * groups,), np.float32)   # PyTorch BN defaults
                beta = np.zeros((cout_pg * groups,), np.float32)
            else:
                gamma = beta = None
            self.layer_params.append((kind, w_np, b_np, gamma, beta))
            self.layers_proc.append(dict(
                kind=kind,
                w_taps=jnp.asarray(_tap_weights(w_np, groups), jnp.bfloat16),
                bias=jnp.asarray(b_np.reshape(-1, 1), jnp.float32),
                gamma=None if gamma is None else jnp.asarray(gamma, jnp.float32),
                beta=None if beta is None else jnp.asarray(beta, jnp.float32),
                out_dtype=jnp.bfloat16 if kind == "block" else jnp.float32,
            ))

        self._u_cache = {}                    # l_in -> bf16 (l_in, l_out)
        self._jit_forward = jax.jit(self._forward)

    def _get_u(self, l_in):
        if l_in not in self._u_cache:
            self._u_cache[l_in] = jnp.asarray(_upsample_matrix(l_in, self.scale),
                                              jnp.bfloat16)
        return self._u_cache[l_in]

    def _forward(self, x_ncl):
        n = x_ncl.shape[0]
        x = x_ncl.astype(jnp.bfloat16)        # native (N, C, L): channels=sublanes, L=lanes
        cur_l = x.shape[2]
        in_scale = in_shift = None
        for lp in self.layers_proc:
            u = self._get_u(cur_l)
            l_out = u.shape[1]
            is_block = lp["kind"] == "block"
            outs = _run_layer(x, u, lp["w_taps"], lp["bias"], in_scale, in_shift,
                              with_stats=is_block, out_dtype=lp["out_dtype"],
                              vmem_limit=self._vmem_limit)
            x = outs[0]
            if is_block:
                # Tiny (Cout,) cross-step reduction + BN -> affine fold (host JAX).
                bsum, bssq = outs[1], outs[2]
                count = float(n * l_out)
                s = jnp.sum(bsum, axis=0)[:, 0]
                ss = jnp.sum(bssq, axis=0)[:, 0]
                mean = s / count
                var = ss / count - mean * mean
                inv = jax.lax.rsqrt(var + _EPS)
                in_scale = (lp["gamma"] * inv).reshape(-1, 1)
                in_shift = (lp["beta"] - mean * lp["gamma"] * inv).reshape(-1, 1)
            cur_l = l_out
        return x.astype(jnp.float32)           # already NCL

    def __call__(self, x_ncl):
        return self._jit_forward(x_ncl)


# ----------------------------------------------------------------------------
# Pure-JAX reference (correctness checking only)
# ----------------------------------------------------------------------------
def _reference_forward(x_ncl, params, groups, scale):
    def upsample(x):
        l = x.shape[2]
        l_out = int(math.floor(l * scale))
        j = jnp.arange(l_out, dtype=jnp.float32)
        src = jnp.maximum((j + 0.5) * (l / l_out) - 0.5, 0.0)
        i0 = jnp.clip(jnp.floor(src).astype(jnp.int32), 0, l - 1)
        i1 = jnp.minimum(i0 + 1, l - 1)
        lam1 = src - i0.astype(jnp.float32)
        lam0 = 1.0 - lam1
        return jnp.take(x, i0, axis=2) * lam0 + jnp.take(x, i1, axis=2) * lam1

    def conv(x, w, b):
        y = jax.lax.conv_general_dilated(
            x, jnp.asarray(w), window_strides=(1,), padding=((1, 1),),
            dimension_numbers=("NCH", "OIH", "NCH"),
            feature_group_count=groups,
            precision=jax.lax.Precision.HIGHEST)
        return y + jnp.asarray(b)[None, :, None]

    h = x_ncl
    for kind, w, b, gamma, beta in params:
        h = conv(upsample(h), w, b)
        if kind == "block":
            mean = jnp.mean(h, axis=(0, 2), keepdims=True)
            var = jnp.mean((h - mean) ** 2, axis=(0, 2), keepdims=True)
            h = (h - mean) * jax.lax.rsqrt(var + _EPS)
            h = h * jnp.asarray(gamma)[None, :, None] + jnp.asarray(beta)[None, :, None]
            h = jnp.where(h >= 0, h, _SLOPE * h)
    return h


# ----------------------------------------------------------------------------
if __name__ == "__main__":
    in_channels, out_channels_list, groups, scale = 4, [8, 4], 2, 2
    N, L = 2, 8

    model = DeconvEstimatorPallas(in_channels, out_channels_list, groups, scale,
                                  key=jax.random.PRNGKey(1))
    x = jax.random.normal(jax.random.PRNGKey(0),
                          (N, in_channels * groups, L), jnp.float32)

    out = jax.block_until_ready(model(x))
    ref = jax.block_until_ready(_reference_forward(x, model.layer_params, groups, scale))

    assert out.shape == (N, 1 * groups, L * scale ** 3), out.shape
    if not jnp.allclose(out, ref, atol=5e-2, rtol=5e-2):
        raise AssertionError(
            f"kernel/reference mismatch, max abs err = {jnp.max(jnp.abs(out - ref))}")
    print("KERNEL_OK")
</pallas_src>

<mosaic_0001>
module attributes {stable_mosaic.version = 11 : i64} {
  func.func @kernel(%arg0: i32, %arg1: memref<1x8x8xbf16, #tpu.memory_space<vmem>>, %arg2: memref<8x16xbf16, #tpu.memory_space<vmem>>, %arg3: memref<3x16x8xbf16, #tpu.memory_space<vmem>>, %arg4: memref<16x1xf32, #tpu.memory_space<vmem>>, %arg5: memref<1x16x16xbf16, #tpu.memory_space<vmem>>, %arg6: memref<1x16x1xf32, #tpu.memory_space<vmem>>, %arg7: memref<1x16x1xf32, #tpu.memory_space<vmem>>) attributes {dimension_semantics = [#tpu.dimension_semantics<parallel>], iteration_bounds = array<i64: 2>, scalar_prefetch = 0 : i64, scratch_operands = 0 : i64, tpu.core_type = #tpu.core_type<tc>, window_params = [{transform_indices = @transform_0, window_bounds = array<i64: 1, 8, 8>}, {pipeline_mode = #tpu.pipeline_mode<synchronous>, transform_indices = @transform_1, window_bounds = array<i64: 8, 16>}, {pipeline_mode = #tpu.pipeline_mode<synchronous>, transform_indices = @transform_2, window_bounds = array<i64: 3, 16, 8>}, {pipeline_mode = #tpu.pipeline_mode<synchronous>, transform_indices = @transform_3, window_bounds = array<i64: 16, 1>}, {transform_indices = @transform_4, window_bounds = array<i64: 1, 16, 16>}, {transform_indices = @transform_5, window_bounds = array<i64: 1, 16, 1>}, {transform_indices = @transform_6, window_bounds = array<i64: 1, 16, 1>}]} {
    %c0 = arith.constant 0 : index
    %c0_0 = arith.constant 0 : index
    %c0_1 = arith.constant 0 : index
    %0 = vector.load %arg1[%c0, %c0_0, %c0_1] : memref<1x8x8xbf16, #tpu.memory_space<vmem>>, vector<1x8x8xbf16>
    %1 = vector.shape_cast %0 : vector<1x8x8xbf16> to vector<8x8xbf16>
    %c0_2 = arith.constant 0 : index
    %c0_3 = arith.constant 0 : index
    %2 = vector.load %arg2[%c0_2, %c0_3] : memref<8x16xbf16, #tpu.memory_space<vmem>>, vector<8x16xbf16>
    %cst = arith.constant dense<0.000000e+00> : vector<8x16xf32>
    %3 = tpu.matmul %1, %2, %cst {dimension_numbers = #tpu.dot_dimension_numbers<[1], [0], [0], [1], [0, 0, 1, 1], [], []>} : vector<8x8xbf16>, vector<8x16xbf16>, vector<8x16xf32> -> vector<8x16xf32>
    %4 = arith.truncf %3 : vector<8x16xf32> to vector<8x16xbf16>
    %cst_4 = arith.constant 0.000000e+00 : bf16
    %5 = vector.broadcast %cst_4 : bf16 to vector<8x1xbf16>
    %6 = vector.extract_strided_slice %4 {offsets = [0, 0], sizes = [8, 15], strides = [1, 1]} : vector<8x16xbf16> to vector<8x15xbf16>
    %7 = tpu.concatenate %5, %6 in 1 : vector<8x1xbf16>, vector<8x15xbf16> -> vector<8x16xbf16>
    %8 = vector.extract_strided_slice %4 {offsets = [0, 1], sizes = [8, 15], strides = [1, 1]} : vector<8x16xbf16> to vector<8x15xbf16>
    %9 = tpu.concatenate %8, %5 in 1 : vector<8x15xbf16>, vector<8x1xbf16> -> vector<8x16xbf16>
    %10 = vector.shape_cast %4 : vector<8x16xbf16> to vector<1x8x16xbf16>
    %11 = vector.shape_cast %7 : vector<8x16xbf16> to vector<1x8x16xbf16>
    %12 = vector.shape_cast %9 : vector<8x16xbf16> to vector<1x8x16xbf16>
    %c0_5 = arith.constant 0 : index
    %c0_6 = arith.constant 0 : index
    %c0_7 = arith.constant 0 : index
    %13 = vector.load %arg3[%c0_5, %c0_6, %c0_7] : memref<3x16x8xbf16, #tpu.memory_space<vmem>>, vector<3x16x8xbf16>
    %14 = vector.extract_strided_slice %13 {offsets = [0, 0, 0], sizes = [1, 16, 8], strides = [1, 1, 1]} : vector<3x16x8xbf16> to vector<1x16x8xbf16>
    %15 = vector.shape_cast %14 : vector<1x16x8xbf16> to vector<16x8xbf16>
    %16 = vector.extract_strided_slice %13 {offsets = [1, 0, 0], sizes = [1, 16, 8], strides = [1, 1, 1]} : vector<3x16x8xbf16> to vector<1x16x8xbf16>
    %17 = vector.shape_cast %16 : vector<1x16x8xbf16> to vector<16x8xbf16>
    %18 = vector.extract_strided_slice %13 {offsets = [2, 0, 0], sizes = [1, 16, 8], strides = [1, 1, 1]} : vector<3x16x8xbf16> to vector<1x16x8xbf16>
    %19 = vector.shape_cast %18 : vector<1x16x8xbf16> to vector<16x8xbf16>
    %c0_8 = arith.constant 0 : index
    %c0_9 = arith.constant 0 : index
    %20 = vector.load %arg4[%c0_8, %c0_9] : memref<16x1xf32, #tpu.memory_space<vmem>>, vector<16x1xf32>
    %cst_10 = arith.constant 0.000000e+00 : f32
    %21 = vector.broadcast %cst_10 : f32 to vector<16x1xf32>
    %cst_11 = arith.constant 0.000000e+00 : f32
    %22 = vector.broadcast %cst_11 : f32 to vector<16x1xf32>
    %23 = vector.shape_cast %11 : vector<1x8x16xbf16> to vector<8x16xbf16>
    %cst_12 = arith.constant dense<0.000000e+00> : vector<16x16xf32>
    %24 = tpu.matmul %15, %23, %cst_12 {dimension_numbers = #tpu.dot_dimension_numbers<[1], [0], [0], [1], [0, 0, 1, 1], [], []>} : vector<16x8xbf16>, vector<8x16xbf16>, vector<16x16xf32> -> vector<16x16xf32>
    %25 = vector.shape_cast %10 : vector<1x8x16xbf16> to vector<8x16xbf16>
    %cst_13 = arith.constant dense<0.000000e+00> : vector<16x16xf32>
    %26 = tpu.matmul %17, %25, %cst_13 {dimension_numbers = #tpu.dot_dimension_numbers<[1], [0], [0], [1], [0, 0, 1, 1], [], []>} : vector<16x8xbf16>, vector<8x16xbf16>, vector<16x16xf32> -> vector<16x16xf32>
    %27 = arith.addf %24, %26 : vector<16x16xf32>
    %28 = vector.shape_cast %12 : vector<1x8x16xbf16> to vector<8x16xbf16>
    %cst_14 = arith.constant dense<0.000000e+00> : vector<16x16xf32>
    %29 = tpu.matmul %19, %28, %cst_14 {dimension_numbers = #tpu.dot_dimension_numbers<[1], [0], [0], [1], [0, 0, 1, 1], [], []>} : vector<16x8xbf16>, vector<8x16xbf16>, vector<16x16xf32> -> vector<16x16xf32>
    %30 = arith.addf %27, %29 : vector<16x16xf32>
    %31 = vector.broadcast %20 : vector<16x1xf32> to vector<16x16xf32>
    %32 = arith.addf %30, %31 : vector<16x16xf32>
    %33 = arith.truncf %32 : vector<16x16xf32> to vector<16x16xbf16>
    %c0_15 = arith.constant 0 : index
    %c0_16 = arith.constant 0 : index
    %c0_17 = arith.constant 0 : index
    %34 = vector.load %arg5[%c0_15, %c0_16, %c0_17] : memref<1x16x16xbf16, #tpu.memory_space<vmem>>, vector<1x16x16xbf16>
    %35 = vector.shape_cast %34 : vector<1x16x16xbf16> to vector<16x16xbf16>
    %36 = vector.shape_cast %33 : vector<16x16xbf16> to vector<1x16x16xbf16>
    tpu.vector_store %arg5[%c0_15, %c0_16, %c0_17], %36 {strides = array<i32>} : memref<1x16x16xbf16, #tpu.memory_space<vmem>>, vector<1x16x16xbf16>,
    %cst_18 = arith.constant dense<0.000000e+00> : vector<16xf32>
    %37 = vector.multi_reduction <add>, %32, %cst_18 [1] : vector<16x16xf32> to vector<16xf32>
    %38 = vector.shape_cast %37 : vector<16xf32> to vector<16x1xf32>
    %39 = arith.addf %21, %38 : vector<16x1xf32>
    %40 = arith.mulf %32, %32 : vector<16x16xf32>
    %cst_19 = arith.constant dense<0.000000e+00> : vector<16xf32>
    %41 = vector.multi_reduction <add>, %40, %cst_19 [1] : vector<16x16xf32> to vector<16xf32>
    %42 = vector.shape_cast %41 : vector<16xf32> to vector<16x1xf32>
    %43 = arith.addf %22, %42 : vector<16x1xf32>
    %c0_20 = arith.constant 0 : index
    %c0_21 = arith.constant 0 : index
    %c0_22 = arith.constant 0 : index
    %44 = vector.load %arg6[%c0_20, %c0_21, %c0_22] : memref<1x16x1xf32, #tpu.memory_space<vmem>>, vector<1x16x1xf32>
    %45 = vector.shape_cast %44 : vector<1x16x1xf32> to vector<16x1xf32>
    %46 = vector.shape_cast %39 : vector<16x1xf32> to vector<1x16x1xf32>
    tpu.vector_store %arg6[%c0_20, %c0_21, %c0_22], %46 {strides = array<i32>} : memref<1x16x1xf32, #tpu.memory_space<vmem>>, vector<1x16x1xf32>,
    %c0_23 = arith.constant 0 : index
    %c0_24 = arith.constant 0 : index
    %c0_25 = arith.constant 0 : index
    %47 = vector.load %arg7[%c0_23, %c0_24, %c0_25] : memref<1x16x1xf32, #tpu.memory_space<vmem>>, vector<1x16x1xf32>
    %48 = vector.shape_cast %47 : vector<1x16x1xf32> to vector<16x1xf32>
    %49 = vector.shape_cast %43 : vector<16x1xf32> to vector<1x16x1xf32>
    tpu.vector_store %arg7[%c0_23, %c0_24, %c0_25], %49 {strides = array<i32>} : memref<1x16x1xf32, #tpu.memory_space<vmem>>, vector<1x16x1xf32>,
    return
  }
  func.func @transform_0(%arg0: i32) -> (i32, i32, i32) {
    %c0_i32 = arith.constant 0 : i32
    %c0_i32_0 = arith.constant 0 : i32
    %c0_i32_1 = arith.constant 0 : i32
    return %arg0, %c0_i32, %c0_i32_0 : i32, i32, i32
  }
  func.func @transform_1(%arg0: i32) -> (i32, i32) {
    %c0_i32 = arith.constant 0 : i32
    %c0_i32_0 = arith.constant 0 : i32
    %c0_i32_1 = arith.constant 0 : i32
    return %c0_i32, %c0_i32_0 : i32, i32
  }
  func.func @transform_2(%arg0: i32) -> (i32, i32, i32) {
    %c0_i32 = arith.constant 0 : i32
    %c0_i32_0 = arith.constant 0 : i32
    %c0_i32_1 = arith.constant 0 : i32
    %c0_i32_2 = arith.constant 0 : i32
    return %c0_i32, %c0_i32_0, %c0_i32_1 : i32, i32, i32
  }
  func.func @transform_3(%arg0: i32) -> (i32, i32) {
    %c0_i32 = arith.constant 0 : i32
    %c0_i32_0 = arith.constant 0 : i32
    %c0_i32_1 = arith.constant 0 : i32
    return %c0_i32, %c0_i32_0 : i32, i32
  }
  func.func @transform_4(%arg0: i32) -> (i32, i32, i32) {
    %c0_i32 = arith.constant 0 : i32
    %c0_i32_0 = arith.constant 0 : i32
    %c0_i32_1 = arith.constant 0 : i32
    return %arg0, %c0_i32, %c0_i32_0 : i32, i32, i32
  }
  func.func @transform_5(%arg0: i32) -> (i32, i32, i32) {
    %c0_i32 = arith.constant 0 : i32
    %c0_i32_0 = arith.constant 0 : i32
    %c0_i32_1 = arith.constant 0 : i32
    return %arg0, %c0_i32, %c0_i32_0 : i32, i32, i32
  }
  func.func @transform_6(%arg0: i32) -> (i32, i32, i32) {
    %c0_i32 = arith.constant 0 : i32
    %c0_i32_0 = arith.constant 0 : i32
    %c0_i32_1 = arith.constant 0 : i32
    return %arg0, %c0_i32, %c0_i32_0 : i32, i32, i32
  }
}

module attributes {stable_mosaic.version = 11 : i64} {
  func.func @kernel(%arg0: i32, %arg1: memref<1x16x16xbf16, #tpu.memory_space<vmem>>, %arg2: memref<16x1xf32, #tpu.memory_space<vmem>>, %arg3: memref<16x1xf32, #tpu.memory_space<vmem>>, %arg4: memref<16x32xbf16, #tpu.memory_space<vmem>>, %arg5: memref<3x8x16xbf16, #tpu.memory_space<vmem>>, %arg6: memref<8x1xf32, #tpu.memory_space<vmem>>, %arg7: memref<1x8x32xbf16, #tpu.memory_space<vmem>>, %arg8: memref<1x8x1xf32, #tpu.memory_space<vmem>>, %arg9: memref<1x8x1xf32, #tpu.memory_space<vmem>>) attributes {dimension_semantics = [#tpu.dimension_semantics<parallel>], iteration_bounds = array<i64: 2>, scalar_prefetch = 0 : i64, scratch_operands = 0 : i64, tpu.core_type = #tpu.core_type<tc>, window_params = [{transform_indices = @transform_0, window_bounds = array<i64: 1, 16, 16>}, {pipeline_mode = #tpu.pipeline_mode<synchronous>, transform_indices = @transform_1, window_bounds = array<i64: 16, 1>}, {pipeline_mode = #tpu.pipeline_mode<synchronous>, transform_indices = @transform_2, window_bounds = array<i64: 16, 1>}, {pipeline_mode = #tpu.pipeline_mode<synchronous>, transform_indices = @transform_3, window_bounds = array<i64: 16, 32>}, {pipeline_mode = #tpu.pipeline_mode<synchronous>, transform_indices = @transform_4, window_bounds = array<i64: 3, 8, 16>}, {pipeline_mode = #tpu.pipeline_mode<synchronous>, transform_indices = @transform_5, window_bounds = array<i64: 8, 1>}, {transform_indices = @transform_6, window_bounds = array<i64: 1, 8, 32>}, {transform_indices = @transform_7, window_bounds = array<i64: 1, 8, 1>}, {transform_indices = @transform_8, window_bounds = array<i64: 1, 8, 1>}]} {
    %c0 = arith.constant 0 : index
    %c0_0 = arith.constant 0 : index
    %c0_1 = arith.constant 0 : index
    %0 = vector.load %arg1[%c0, %c0_0, %c0_1] : memref<1x16x16xbf16, #tpu.memory_space<vmem>>, vector<1x16x16xbf16>
    %1 = arith.extf %0 : vector<1x16x16xbf16> to vector<1x16x16xf32>
    %c0_2 = arith.constant 0 : index
    %c0_3 = arith.constant 0 : index
    %2 = vector.load %arg2[%c0_2, %c0_3] : memref<16x1xf32, #tpu.memory_space<vmem>>, vector<16x1xf32>
    %3 = vector.shape_cast %2 : vector<16x1xf32> to vector<1x16x1xf32>
    %4 = vector.broadcast %3 : vector<1x16x1xf32> to vector<1x16x16xf32>
    %5 = arith.mulf %1, %4 : vector<1x16x16xf32>
    %c0_4 = arith.constant 0 : index
    %c0_5 = arith.constant 0 : index
    %6 = vector.load %arg3[%c0_4, %c0_5] : memref<16x1xf32, #tpu.memory_space<vmem>>, vector<16x1xf32>
    %7 = vector.shape_cast %6 : vector<16x1xf32> to vector<1x16x1xf32>
    %8 = vector.broadcast %7 : vector<1x16x1xf32> to vector<1x16x16xf32>
    %9 = arith.addf %5, %8 : vector<1x16x16xf32>
    %cst = arith.constant 0.000000e+00 : f32
    %10 = vector.broadcast %cst : f32 to vector<1x16x16xf32>
    %11 = arith.cmpf oge, %9, %10 : vector<1x16x16xf32>
    %cst_6 = arith.constant 2.000000e-01 : f32
    %12 = vector.broadcast %cst_6 : f32 to vector<1x16x16xf32>
    %13 = arith.mulf %12, %9 : vector<1x16x16xf32>
    %14 = arith.select %11, %9, %13 : vector<1x16x16xi1>, vector<1x16x16xf32>
    %15 = arith.truncf %14 : vector<1x16x16xf32> to vector<1x16x16xbf16>
    %16 = vector.shape_cast %15 : vector<1x16x16xbf16> to vector<16x16xbf16>
    %c0_7 = arith.constant 0 : index
    %c0_8 = arith.constant 0 : index
    %17 = vector.load %arg4[%c0_7, %c0_8] : memref<16x32xbf16, #tpu.memory_space<vmem>>, vector<16x32xbf16>
    %cst_9 = arith.constant dense<0.000000e+00> : vector<16x32xf32>
    %18 = tpu.matmul %16, %17, %cst_9 {dimension_numbers = #tpu.dot_dimension_numbers<[1], [0], [0], [1], [0, 0, 1, 1], [], []>} : vector<16x16xbf16>, vector<16x32xbf16>, vector<16x32xf32> -> vector<16x32xf32>
    %19 = arith.truncf %18 : vector<16x32xf32> to vector<16x32xbf16>
    %cst_10 = arith.constant 0.000000e+00 : bf16
    %20 = vector.broadcast %cst_10 : bf16 to vector<16x1xbf16>
    %21 = vector.extract_strided_slice %19 {offsets = [0, 0], sizes = [16, 31], strides = [1, 1]} : vector<16x32xbf16> to vector<16x31xbf16>
    %22 = tpu.concatenate %20, %21 in 1 : vector<16x1xbf16>, vector<16x31xbf16> -> vector<16x32xbf16>
    %23 = vector.extract_strided_slice %19 {offsets = [0, 1], sizes = [16, 31], strides = [1, 1]} : vector<16x32xbf16> to vector<16x31xbf16>
    %24 = tpu.concatenate %23, %20 in 1 : vector<16x31xbf16>, vector<16x1xbf16> -> vector<16x32xbf16>
    %25 = vector.shape_cast %19 : vector<16x32xbf16> to vector<1x16x32xbf16>
    %26 = vector.shape_cast %22 : vector<16x32xbf16> to vector<1x16x32xbf16>
    %27 = vector.shape_cast %24 : vector<16x32xbf16> to vector<1x16x32xbf16>
    %c0_11 = arith.constant 0 : index
    %c0_12 = arith.constant 0 : index
    %c0_13 = arith.constant 0 : index
    %28 = vector.load %arg5[%c0_11, %c0_12, %c0_13] : memref<3x8x16xbf16, #tpu.memory_space<vmem>>, vector<3x8x16xbf16>
    %29 = vector.extract_strided_slice %28 {offsets = [0, 0, 0], sizes = [1, 8, 16], strides = [1, 1, 1]} : vector<3x8x16xbf16> to vector<1x8x16xbf16>
    %30 = vector.shape_cast %29 : vector<1x8x16xbf16> to vector<8x16xbf16>
    %31 = vector.extract_strided_slice %28 {offsets = [1, 0, 0], sizes = [1, 8, 16], strides = [1, 1, 1]} : vector<3x8x16xbf16> to vector<1x8x16xbf16>
    %32 = vector.shape_cast %31 : vector<1x8x16xbf16> to vector<8x16xbf16>
    %33 = vector.extract_strided_slice %28 {offsets = [2, 0, 0], sizes = [1, 8, 16], strides = [1, 1, 1]} : vector<3x8x16xbf16> to vector<1x8x16xbf16>
    %34 = vector.shape_cast %33 : vector<1x8x16xbf16> to vector<8x16xbf16>
    %c0_14 = arith.constant 0 : index
    %c0_15 = arith.constant 0 : index
    %35 = vector.load %arg6[%c0_14, %c0_15] : memref<8x1xf32, #tpu.memory_space<vmem>>, vector<8x1xf32>
    %cst_16 = arith.constant 0.000000e+00 : f32
    %36 = vector.broadcast %cst_16 : f32 to vector<8x1xf32>
    %cst_17 = arith.constant 0.000000e+00 : f32
    %37 = vector.broadcast %cst_17 : f32 to vector<8x1xf32>
    %38 = vector.shape_cast %26 : vector<1x16x32xbf16> to vector<16x32xbf16>
    %cst_18 = arith.constant dense<0.000000e+00> : vector<8x32xf32>
    %39 = tpu.matmul %30, %38, %cst_18 {dimension_numbers = #tpu.dot_dimension_numbers<[1], [0], [0], [1], [0, 0, 1, 1], [], []>} : vector<8x16xbf16>, vector<16x32xbf16>, vector<8x32xf32> -> vector<8x32xf32>
    %40 = vector.shape_cast %25 : vector<1x16x32xbf16> to vector<16x32xbf16>
    %cst_19 = arith.constant dense<0.000000e+00> : vector<8x32xf32>
    %41 = tpu.matmul %32, %40, %cst_19 {dimension_numbers = #tpu.dot_dimension_numbers<[1], [0], [0], [1], [0, 0, 1, 1], [], []>} : vector<8x16xbf16>, vector<16x32xbf16>, vector<8x32xf32> -> vector<8x32xf32>
    %42 = arith.addf %39, %41 : vector<8x32xf32>
    %43 = vector.shape_cast %27 : vector<1x16x32xbf16> to vector<16x32xbf16>
    %cst_20 = arith.constant dense<0.000000e+00> : vector<8x32xf32>
    %44 = tpu.matmul %34, %43, %cst_20 {dimension_numbers = #tpu.dot_dimension_numbers<[1], [0], [0], [1], [0, 0, 1, 1], [], []>} : vector<8x16xbf16>, vector<16x32xbf16>, vector<8x32xf32> -> vector<8x32xf32>
    %45 = arith.addf %42, %44 : vector<8x32xf32>
    %46 = vector.broadcast %35 : vector<8x1xf32> to vector<8x32xf32>
    %47 = arith.addf %45, %46 : vector<8x32xf32>
    %48 = arith.truncf %47 : vector<8x32xf32> to vector<8x32xbf16>
    %c0_21 = arith.constant 0 : index
    %c0_22 = arith.constant 0 : index
    %c0_23 = arith.constant 0 : index
    %49 = vector.load %arg7[%c0_21, %c0_22, %c0_23] : memref<1x8x32xbf16, #tpu.memory_space<vmem>>, vector<1x8x32xbf16>
    %50 = vector.shape_cast %49 : vector<1x8x32xbf16> to vector<8x32xbf16>
    %51 = vector.shape_cast %48 : vector<8x32xbf16> to vector<1x8x32xbf16>
    tpu.vector_store %arg7[%c0_21, %c0_22, %c0_23], %51 {strides = array<i32>} : memref<1x8x32xbf16, #tpu.memory_space<vmem>>, vector<1x8x32xbf16>,
    %cst_24 = arith.constant dense<0.000000e+00> : vector<8xf32>
    %52 = vector.multi_reduction <add>, %47, %cst_24 [1] : vector<8x32xf32> to vector<8xf32>
    %53 = vector.shape_cast %52 : vector<8xf32> to vector<8x1xf32>
    %54 = arith.addf %36, %53 : vector<8x1xf32>
    %55 = arith.mulf %47, %47 : vector<8x32xf32>
    %cst_25 = arith.constant dense<0.000000e+00> : vector<8xf32>
    %56 = vector.multi_reduction <add>, %55, %cst_25 [1] : vector<8x32xf32> to vector<8xf32>
    %57 = vector.shape_cast %56 : vector<8xf32> to vector<8x1xf32>
    %58 = arith.addf %37, %57 : vector<8x1xf32>
    %c0_26 = arith.constant 0 : index
    %c0_27 = arith.constant 0 : index
    %c0_28 = arith.constant 0 : index
    %59 = vector.load %arg8[%c0_26, %c0_27, %c0_28] : memref<1x8x1xf32, #tpu.memory_space<vmem>>, vector<1x8x1xf32>
    %60 = vector.shape_cast %59 : vector<1x8x1xf32> to vector<8x1xf32>
    %61 = vector.shape_cast %54 : vector<8x1xf32> to vector<1x8x1xf32>
    tpu.vector_store %arg8[%c0_26, %c0_27, %c0_28], %61 {strides = array<i32>} : memref<1x8x1xf32, #tpu.memory_space<vmem>>, vector<1x8x1xf32>,
    %c0_29 = arith.constant 0 : index
    %c0_30 = arith.constant 0 : index
    %c0_31 = arith.constant 0 : index
    %62 = vector.load %arg9[%c0_29, %c0_30, %c0_31] : memref<1x8x1xf32, #tpu.memory_space<vmem>>, vector<1x8x1xf32>
    %63 = vector.shape_cast %62 : vector<1x8x1xf32> to vector<8x1xf32>
    %64 = vector.shape_cast %58 : vector<8x1xf32> to vector<1x8x1xf32>
    tpu.vector_store %arg9[%c0_29, %c0_30, %c0_31], %64 {strides = array<i32>} : memref<1x8x1xf32, #tpu.memory_space<vmem>>, vector<1x8x1xf32>,
    return
  }
  func.func @transform_0(%arg0: i32) -> (i32, i32, i32) {
    %c0_i32 = arith.constant 0 : i32
    %c0_i32_0 = arith.constant 0 : i32
    %c0_i32_1 = arith.constant 0 : i32
    return %arg0, %c0_i32, %c0_i32_0 : i32, i32, i32
  }
  func.func @transform_1(%arg0: i32) -> (i32, i32) {
    %c0_i32 = arith.constant 0 : i32
    %c0_i32_0 = arith.constant 0 : i32
    %c0_i32_1 = arith.constant 0 : i32
    return %c0_i32, %c0_i32_0 : i32, i32
  }
  func.func @transform_2(%arg0: i32) -> (i32, i32) {
    %c0_i32 = arith.constant 0 : i32
    %c0_i32_0 = arith.constant 0 : i32
    %c0_i32_1 = arith.constant 0 : i32
    return %c0_i32, %c0_i32_0 : i32, i32
  }
  func.func @transform_3(%arg0: i32) -> (i32, i32) {
    %c0_i32 = arith.constant 0 : i32
    %c0_i32_0 = arith.constant 0 : i32
    %c0_i32_1 = arith.constant 0 : i32
    return %c0_i32, %c0_i32_0 : i32, i32
  }
  func.func @transform_4(%arg0: i32) -> (i32, i32, i32) {
    %c0_i32 = arith.constant 0 : i32
    %c0_i32_0 = arith.constant 0 : i32
    %c0_i32_1 = arith.constant 0 : i32
    %c0_i32_2 = arith.constant 0 : i32
    return %c0_i32, %c0_i32_0, %c0_i32_1 : i32, i32, i32
  }
  func.func @transform_5(%arg0: i32) -> (i32, i32) {
    %c0_i32 = arith.constant 0 : i32
    %c0_i32_0 = arith.constant 0 : i32
    %c0_i32_1 = arith.constant 0 : i32
    return %c0_i32, %c0_i32_0 : i32, i32
  }
  func.func @transform_6(%arg0: i32) -> (i32, i32, i32) {
    %c0_i32 = arith.constant 0 : i32
    %c0_i32_0 = arith.constant 0 : i32
    %c0_i32_1 = arith.constant 0 : i32
    return %arg0, %c0_i32, %c0_i32_0 : i32, i32, i32
  }
  func.func @transform_7(%arg0: i32) -> (i32, i32, i32) {
    %c0_i32 = arith.constant 0 : i32
    %c0_i32_0 = arith.constant 0 : i32
    %c0_i32_1 = arith.constant 0 : i32
    return %arg0, %c0_i32, %c0_i32_0 : i32, i32, i32
  }
  func.func @transform_8(%arg0: i32) -> (i32, i32, i32) {
    %c0_i32 = arith.constant 0 : i32
    %c0_i32_0 = arith.constant 0 : i32
    %c0_i32_1 = arith.constant 0 : i32
    return %arg0, %c0_i32, %c0_i32_0 : i32, i32, i32
  }
}

module attributes {stable_mosaic.version = 11 : i64} {
  func.func @kernel(%arg0: i32, %arg1: memref<1x8x32xbf16, #tpu.memory_space<vmem>>, %arg2: memref<8x1xf32, #tpu.memory_space<vmem>>, %arg3: memref<8x1xf32, #tpu.memory_space<vmem>>, %arg4: memref<32x64xbf16, #tpu.memory_space<vmem>>, %arg5: memref<3x2x8xbf16, #tpu.memory_space<vmem>>, %arg6: memref<2x1xf32, #tpu.memory_space<vmem>>, %arg7: memref<1x2x64xf32, #tpu.memory_space<vmem>>) attributes {dimension_semantics = [#tpu.dimension_semantics<parallel>], iteration_bounds = array<i64: 2>, scalar_prefetch = 0 : i64, scratch_operands = 0 : i64, tpu.core_type = #tpu.core_type<tc>, window_params = [{transform_indices = @transform_0, window_bounds = array<i64: 1, 8, 32>}, {pipeline_mode = #tpu.pipeline_mode<synchronous>, transform_indices = @transform_1, window_bounds = array<i64: 8, 1>}, {pipeline_mode = #tpu.pipeline_mode<synchronous>, transform_indices = @transform_2, window_bounds = array<i64: 8, 1>}, {pipeline_mode = #tpu.pipeline_mode<synchronous>, transform_indices = @transform_3, window_bounds = array<i64: 32, 64>}, {pipeline_mode = #tpu.pipeline_mode<synchronous>, transform_indices = @transform_4, window_bounds = array<i64: 3, 2, 8>}, {pipeline_mode = #tpu.pipeline_mode<synchronous>, transform_indices = @transform_5, window_bounds = array<i64: 2, 1>}, {transform_indices = @transform_6, window_bounds = array<i64: 1, 2, 64>}]} {
    %c0 = arith.constant 0 : index
    %c0_0 = arith.constant 0 : index
    %c0_1 = arith.constant 0 : index
    %0 = vector.load %arg1[%c0, %c0_0, %c0_1] : memref<1x8x32xbf16, #tpu.memory_space<vmem>>, vector<1x8x32xbf16>
    %1 = arith.extf %0 : vector<1x8x32xbf16> to vector<1x8x32xf32>
    %c0_2 = arith.constant 0 : index
    %c0_3 = arith.constant 0 : index
    %2 = vector.load %arg2[%c0_2, %c0_3] : memref<8x1xf32, #tpu.memory_space<vmem>>, vector<8x1xf32>
    %3 = vector.shape_cast %2 : vector<8x1xf32> to vector<1x8x1xf32>
    %4 = vector.broadcast %3 : vector<1x8x1xf32> to vector<1x8x32xf32>
    %5 = arith.mulf %1, %4 : vector<1x8x32xf32>
    %c0_4 = arith.constant 0 : index
    %c0_5 = arith.constant 0 : index
    %6 = vector.load %arg3[%c0_4, %c0_5] : memref<8x1xf32, #tpu.memory_space<vmem>>, vector<8x1xf32>
    %7 = vector.shape_cast %6 : vector<8x1xf32> to vector<1x8x1xf32>
    %8 = vector.broadcast %7 : vector<1x8x1xf32> to vector<1x8x32xf32>
    %9 = arith.addf %5, %8 : vector<1x8x32xf32>
    %cst = arith.constant 0.000000e+00 : f32
    %10 = vector.broadcast %cst : f32 to vector<1x8x32xf32>
    %11 = arith.cmpf oge, %9, %10 : vector<1x8x32xf32>
    %cst_6 = arith.constant 2.000000e-01 : f32
    %12 = vector.broadcast %cst_6 : f32 to vector<1x8x32xf32>
    %13 = arith.mulf %12, %9 : vector<1x8x32xf32>
    %14 = arith.select %11, %9, %13 : vector<1x8x32xi1>, vector<1x8x32xf32>
    %15 = arith.truncf %14 : vector<1x8x32xf32> to vector<1x8x32xbf16>
    %16 = vector.shape_cast %15 : vector<1x8x32xbf16> to vector<8x32xbf16>
    %c0_7 = arith.constant 0 : index
    %c0_8 = arith.constant 0 : index
    %17 = vector.load %arg4[%c0_7, %c0_8] : memref<32x64xbf16, #tpu.memory_space<vmem>>, vector<32x64xbf16>
    %cst_9 = arith.constant dense<0.000000e+00> : vector<8x64xf32>
    %18 = tpu.matmul %16, %17, %cst_9 {dimension_numbers = #tpu.dot_dimension_numbers<[1], [0], [0], [1], [0, 0, 1, 1], [], []>} : vector<8x32xbf16>, vector<32x64xbf16>, vector<8x64xf32> -> vector<8x64xf32>
    %19 = arith.truncf %18 : vector<8x64xf32> to vector<8x64xbf16>
    %cst_10 = arith.constant 0.000000e+00 : bf16
    %20 = vector.broadcast %cst_10 : bf16 to vector<8x1xbf16>
    %21 = vector.extract_strided_slice %19 {offsets = [0, 0], sizes = [8, 63], strides = [1, 1]} : vector<8x64xbf16> to vector<8x63xbf16>
    %22 = tpu.concatenate %20, %21 in 1 : vector<8x1xbf16>, vector<8x63xbf16> -> vector<8x64xbf16>
    %23 = vector.extract_strided_slice %19 {offsets = [0, 1], sizes = [8, 63], strides = [1, 1]} : vector<8x64xbf16> to vector<8x63xbf16>
    %24 = tpu.concatenate %23, %20 in 1 : vector<8x63xbf16>, vector<8x1xbf16> -> vector<8x64xbf16>
    %25 = vector.shape_cast %19 : vector<8x64xbf16> to vector<1x8x64xbf16>
    %26 = vector.shape_cast %22 : vector<8x64xbf16> to vector<1x8x64xbf16>
    %27 = vector.shape_cast %24 : vector<8x64xbf16> to vector<1x8x64xbf16>
    %c0_11 = arith.constant 0 : index
    %c0_12 = arith.constant 0 : index
    %c0_13 = arith.constant 0 : index
    %28 = vector.load %arg5[%c0_11, %c0_12, %c0_13] : memref<3x2x8xbf16, #tpu.memory_space<vmem>>, vector<3x2x8xbf16>
    %29 = vector.extract_strided_slice %28 {offsets = [0, 0, 0], sizes = [1, 2, 8], strides = [1, 1, 1]} : vector<3x2x8xbf16> to vector<1x2x8xbf16>
    %30 = vector.shape_cast %29 : vector<1x2x8xbf16> to vector<2x8xbf16>
    %31 = vector.extract_strided_slice %28 {offsets = [1, 0, 0], sizes = [1, 2, 8], strides = [1, 1, 1]} : vector<3x2x8xbf16> to vector<1x2x8xbf16>
    %32 = vector.shape_cast %31 : vector<1x2x8xbf16> to vector<2x8xbf16>
    %33 = vector.extract_strided_slice %28 {offsets = [2, 0, 0], sizes = [1, 2, 8], strides = [1, 1, 1]} : vector<3x2x8xbf16> to vector<1x2x8xbf16>
    %34 = vector.shape_cast %33 : vector<1x2x8xbf16> to vector<2x8xbf16>
    %c0_14 = arith.constant 0 : index
    %c0_15 = arith.constant 0 : index
    %35 = vector.load %arg6[%c0_14, %c0_15] : memref<2x1xf32, #tpu.memory_space<vmem>>, vector<2x1xf32>
    %36 = vector.shape_cast %26 : vector<1x8x64xbf16> to vector<8x64xbf16>
    %cst_16 = arith.constant dense<0.000000e+00> : vector<2x64xf32>
    %37 = tpu.matmul %30, %36, %cst_16 {dimension_numbers = #tpu.dot_dimension_numbers<[1], [0], [0], [1], [0, 0, 1, 1], [], []>} : vector<2x8xbf16>, vector<8x64xbf16>, vector<2x64xf32> -> vector<2x64xf32>
    %38 = vector.shape_cast %25 : vector<1x8x64xbf16> to vector<8x64xbf16>
    %cst_17 = arith.constant dense<0.000000e+00> : vector<2x64xf32>
    %39 = tpu.matmul %32, %38, %cst_17 {dimension_numbers = #tpu.dot_dimension_numbers<[1], [0], [0], [1], [0, 0, 1, 1], [], []>} : vector<2x8xbf16>, vector<8x64xbf16>, vector<2x64xf32> -> vector<2x64xf32>
    %40 = arith.addf %37, %39 : vector<2x64xf32>
    %41 = vector.shape_cast %27 : vector<1x8x64xbf16> to vector<8x64xbf16>
    %cst_18 = arith.constant dense<0.000000e+00> : vector<2x64xf32>
    %42 = tpu.matmul %34, %41, %cst_18 {dimension_numbers = #tpu.dot_dimension_numbers<[1], [0], [0], [1], [0, 0, 1, 1], [], []>} : vector<2x8xbf16>, vector<8x64xbf16>, vector<2x64xf32> -> vector<2x64xf32>
    %43 = arith.addf %40, %42 : vector<2x64xf32>
    %44 = vector.broadcast %35 : vector<2x1xf32> to vector<2x64xf32>
    %45 = arith.addf %43, %44 : vector<2x64xf32>
    %c0_19 = arith.constant 0 : index
    %c0_20 = arith.constant 0 : index
    %c0_21 = arith.constant 0 : index
    %46 = vector.load %arg7[%c0_19, %c0_20, %c0_21] : memref<1x2x64xf32, #tpu.memory_space<vmem>>, vector<1x2x64xf32>
    %47 = vector.shape_cast %46 : vector<1x2x64xf32> to vector<2x64xf32>
    %48 = vector.shape_cast %45 : vector<2x64xf32> to vector<1x2x64xf32>
    tpu.vector_store %arg7[%c0_19, %c0_20, %c0_21], %48 {strides = array<i32>} : memref<1x2x64xf32, #tpu.memory_space<vmem>>, vector<1x2x64xf32>,
    return
  }
  func.func @transform_0(%arg0: i32) -> (i32, i32, i32) {
    %c0_i32 = arith.constant 0 : i32
    %c0_i32_0 = arith.constant 0 : i32
    %c0_i32_1 = arith.constant 0 : i32
    return %arg0, %c0_i32, %c0_i32_0 : i32, i32, i32
  }
  func.func @transform_1(%arg0: i32) -> (i32, i32) {
    %c0_i32 = arith.constant 0 : i32
    %c0_i32_0 = arith.constant 0 : i32
    %c0_i32_1 = arith.constant 0 : i32
    return %c0_i32, %c0_i32_0 : i32, i32
  }
  func.func @transform_2(%arg0: i32) -> (i32, i32) {
    %c0_i32 = arith.constant 0 : i32
    %c0_i32_0 = arith.constant 0 : i32
    %c0_i32_1 = arith.constant 0 : i32
    return %c0_i32, %c0_i32_0 : i32, i32
  }
  func.func @transform_3(%arg0: i32) -> (i32, i32) {
    %c0_i32 = arith.constant 0 : i32
    %c0_i32_0 = arith.constant 0 : i32
    %c0_i32_1 = arith.constant 0 : i32
    return %c0_i32, %c0_i32_0 : i32, i32
  }
  func.func @transform_4(%arg0: i32) -> (i32, i32, i32) {
    %c0_i32 = arith.constant 0 : i32
    %c0_i32_0 = arith.constant 0 : i32
    %c0_i32_1 = arith.constant 0 : i32
    %c0_i32_2 = arith.constant 0 : i32
    return %c0_i32, %c0_i32_0, %c0_i32_1 : i32, i32, i32
  }
  func.func @transform_5(%arg0: i32) -> (i32, i32) {
    %c0_i32 = arith.constant 0 : i32
    %c0_i32_0 = arith.constant 0 : i32
    %c0_i32_1 = arith.constant 0 : i32
    return %c0_i32, %c0_i32_0 : i32, i32
  }
  func.func @transform_6(%arg0: i32) -> (i32, i32, i32) {
    %c0_i32 = arith.constant 0 : i32
    %c0_i32_0 = arith.constant 0 : i32
    %c0_i32_1 = arith.constant 0 : i32
    return %arg0, %c0_i32, %c0_i32_0 : i32, i32, i32
  }
}

</mosaic_0001>

<llo_original>
// kernel: _forward.3
$region0: #{_forward.3}
  #allocation0 [shape = 'u32[]', space=smem, size = 0x4, offset = 0x4, fixed_abs, tag = 'smem constant byte address 0x4 - core index']
  #allocation1 [shape = 'u32[144,128]{1,0:T(1,128)}', space=vmem, size = 0x12000, scoped, tag = 'internal scratch']
  %s0 = inlined_call_operand.vmem [shape: bf16[2,8,8], index: 0, kind: input, shape index: {}]
  %s1 = inlined_call_operand.vmem [shape: bf16[8,16], index: 1, kind: input, shape index: {}]
  %s2 = inlined_call_operand.vmem [shape: bf16[3,16,8], index: 2, kind: input, shape index: {}]
  %s3 = inlined_call_operand.vmem [shape: f32[16,1], index: 3, kind: input, shape index: {}]
  %s4 = inlined_call_operand.vmem [shape: bf16[2,16,16], index: 4, kind: output, shape index: {0}]
  %s5 = inlined_call_operand.vmem [shape: f32[2,16,1], index: 5, kind: output, shape index: {1}]
  %s6 = inlined_call_operand.vmem [shape: f32[2,16,1], index: 6, kind: output, shape index: {2}]
  %7 = xla_tuple %s4, %s5, %s6
  %s8 = sld [smem:[#allocation0]]
  $region65: #{_forward.3} parent=0
    _
  %s10 = ssub.s32 1, %s8
  %s11 = scalar_select 0, %s10, %s8
  loop: start=0, step=1, limit=4
  $region2: #{_forward.3} parent=0 // loop_pre_header
    _
  $region3: #{_forward.3} parent=0 // loop_header
    %s13 = sphi 0, %s17
    %p14 = scmp.ge.s32.totalorder %s13, 4
    %s23 = sphi 0, %s25
    %s26 = sphi 0, %s23
    %s27 = sphi 0, %s26
    %s43 = sphi 0, %s27
    %s47 = sphi 0, %s47
    %s49 = sphi 0, %s47
    %s50 = sphi 0, %s49
    %s64 = sphi 0, %s50
    %s68 = sphi 0, %s68
    %s70 = sphi 0, %s68
    %s71 = sphi 0, %s70
    %s85 = sphi 0, %s71
    %s89 = sphi 0, %s89
    %s91 = sphi 0, %s89
    %s92 = sphi 0, %s91
    %s106 = sphi 0, %s92
    %s112 = sphi 0, %s114
    %s115 = sphi 0, %s112
    %s116 = sphi 0, %s115
    %s132 = sphi 0, %s116
    %s138 = sphi 0, %s140
    %s141 = sphi 0, %s138
    %s142 = sphi 0, %s141
    %s158 = sphi 0, %s142
    %s164 = sphi 0, %s166
    %s167 = sphi 0, %s164
    %s168 = sphi 0, %s167
    %s184 = sphi 0, %s168
  $region4: #{_forward.3} parent=0 // loop_header_branch
    %16 = sbr.rel (%p14) target = $region8
  $region5: #{_forward.3} parent=0 // loop_body
    %s18 = ssub.s32 %s13, 1
    %s19 = ssub.s32 %s13, 2
    %s20 = sadd.s32 %s13, 1
    %s21 = ssub.s32 %s13, %s20
    %p22 = scmp.eq.s32.totalorder %s21, 0
    %s24 = sadd.s32 %s23, 1
    %s25 = scalar_select %p22, %s23, %s24
    %p28 = pneg %p22
    %p29 = scmp.eq.s32.totalorder %s13, 1
    %p30 = por %p28, %p29
    %p31 = scmp.ne.s32.totalorder %s23, %s26
    %p32 = scmp.eq.s32.totalorder %s13, 0
    %p33 = por %p31, %p32
    %p34 = scmp.ne.s32.totalorder %s23, %s26
    %p35 = scmp.eq.s32.totalorder %s18, 1
    %p36 = por %p34, %p35
    %p37 = scmp.ne.s32.totalorder %s26, %s27
    %p38 = scmp.eq.s32.totalorder %s18, 0
    %p39 = por %p37, %p38
    %p40 = scmp.ne.s32.totalorder %s26, %s27
    %p41 = scmp.eq.s32.totalorder %s19, 1
    %p42 = por %p40, %p41
    %p44 = scmp.ne.s32.totalorder %s27, %s43
    %p45 = scmp.eq.s32.totalorder %s19, 0
    %p46 = por %p44, %p45
    %s48 = sadd.s32 %s47, 1
    %p51 = scmp.eq.s32.totalorder %s13, 1
    %p52 = scmp.ne.s32.totalorder %s47, %s49
    %p53 = scmp.eq.s32.totalorder %s13, 0
    %p54 = por %p52, %p53
    %p55 = scmp.ne.s32.totalorder %s47, %s49
    %p56 = scmp.eq.s32.totalorder %s18, 1
    %p57 = por %p55, %p56
    %p58 = scmp.ne.s32.totalorder %s49, %s50
    %p59 = scmp.eq.s32.totalorder %s18, 0
    %p60 = por %p58, %p59
    %p61 = scmp.ne.s32.totalorder %s49, %s50
    %p62 = scmp.eq.s32.totalorder %s19, 1
    %p63 = por %p61, %p62
    %p65 = scmp.ne.s32.totalorder %s50, %s64
    %p66 = scmp.eq.s32.totalorder %s19, 0
    %p67 = por %p65, %p66
    %s69 = sadd.s32 %s68, 1
    %p72 = scmp.eq.s32.totalorder %s13, 1
    %p73 = scmp.ne.s32.totalorder %s68, %s70
    %p74 = scmp.eq.s32.totalorder %s13, 0
    %p75 = por %p73, %p74
    %p76 = scmp.ne.s32.totalorder %s68, %s70
    %p77 = scmp.eq.s32.totalorder %s18, 1
    %p78 = por %p76, %p77
    %p79 = scmp.ne.s32.totalorder %s70, %s71
    %p80 = scmp.eq.s32.totalorder %s18, 0
    %p81 = por %p79, %p80
    %p82 = scmp.ne.s32.totalorder %s70, %s71
    %p83 = scmp.eq.s32.totalorder %s19, 1
    %p84 = por %p82, %p83
    %p86 = scmp.ne.s32.totalorder %s71, %s85
    %p87 = scmp.eq.s32.totalorder %s19, 0
    %p88 = por %p86, %p87
    %s90 = sadd.s32 %s89, 1
    %p93 = scmp.eq.s32.totalorder %s13, 1
    %p94 = scmp.ne.s32.totalorder %s89, %s91
    %p95 = scmp.eq.s32.totalorder %s13, 0
    %p96 = por %p94, %p95
    %p97 = scmp.ne.s32.totalorder %s89, %s91
    %p98 = scmp.eq.s32.totalorder %s18, 1
    %p99 = por %p97, %p98
    %p100 = scmp.ne.s32.totalorder %s91, %s92
    %p101 = scmp.eq.s32.totalorder %s18, 0
    %p102 = por %p100, %p101
    %p103 = scmp.ne.s32.totalorder %s91, %s92
    %p104 = scmp.eq.s32.totalorder %s19, 1
    %p105 = por %p103, %p104
    %p107 = scmp.ne.s32.totalorder %s92, %s106
    %p108 = scmp.eq.s32.totalorder %s19, 0
    %p109 = por %p107, %p108
    %s110 = ssub.s32 %s13, %s20
    %p111 = scmp.eq.s32.totalorder %s110, 0
    %s113 = sadd.s32 %s112, 1
    %s114 = scalar_select %p111, %s112, %s113
    %p117 = pneg %p111
    %p118 = scmp.eq.s32.totalorder %s13, 1
    %p119 = por %p117, %p118
    %p120 = scmp.ne.s32.totalorder %s112, %s115
    %p121 = scmp.eq.s32.totalorder %s13, 0
    %p122 = por %p120, %p121
    %p123 = scmp.ne.s32.totalorder %s112, %s115
    %p124 = scmp.eq.s32.totalorder %s18, 1
    %p125 = por %p123, %p124
    %p126 = scmp.ne.s32.totalorder %s115, %s116
    %p127 = scmp.eq.s32.totalorder %s18, 0
    %p128 = por %p126, %p127
    %p129 = scmp.ne.s32.totalorder %s115, %s116
    %p130 = scmp.eq.s32.totalorder %s19, 1
    %p131 = por %p129, %p130
    %p133 = scmp.ne.s32.totalorder %s116, %s132
    %p134 = scmp.eq.s32.totalorder %s19, 0
    %p135 = por %p133, %p134
    %s136 = ssub.s32 %s13, %s20
    %p137 = scmp.eq.s32.totalorder %s136, 0
    %s139 = sadd.s32 %s138, 1
    %s140 = scalar_select %p137, %s138, %s139
    %p143 = pneg %p137
    %p144 = scmp.eq.s32.totalorder %s13, 1
    %p145 = por %p143, %p144
    %p146 = scmp.ne.s32.totalorder %s138, %s141
    %p147 = scmp.eq.s32.totalorder %s13, 0
    %p148 = por %p146, %p147
    %p149 = scmp.ne.s32.totalorder %s138, %s141
    %p150 = scmp.eq.s32.totalorder %s18, 1
    %p151 = por %p149, %p150
    %p152 = scmp.ne.s32.totalorder %s141, %s142
    %p153 = scmp.eq.s32.totalorder %s18, 0
    %p154 = por %p152, %p153
    %p155 = scmp.ne.s32.totalorder %s141, %s142
    %p156 = scmp.eq.s32.totalorder %s19, 1
    %p157 = por %p155, %p156
    %p159 = scmp.ne.s32.totalorder %s142, %s158
    %p160 = scmp.eq.s32.totalorder %s19, 0
    %p161 = por %p159, %p160
    %s162 = ssub.s32 %s13, %s20
    %p163 = scmp.eq.s32.totalorder %s162, 0
    %s165 = sadd.s32 %s164, 1
    %s166 = scalar_select %p163, %s164, %s165
    %p169 = pneg %p163
    %p170 = scmp.eq.s32.totalorder %s13, 1
    %p171 = por %p169, %p170
    %p172 = scmp.ne.s32.totalorder %s164, %s167
    %p173 = scmp.eq.s32.totalorder %s13, 0
    %p174 = por %p172, %p173
    %p175 = scmp.ne.s32.totalorder %s164, %s167
    %p176 = scmp.eq.s32.totalorder %s18, 1
    %p177 = por %p175, %p176
    %p178 = scmp.ne.s32.totalorder %s167, %s168
    %p179 = scmp.eq.s32.totalorder %s18, 0
    %p180 = por %p178, %p179
    %p181 = scmp.ne.s32.totalorder %s167, %s168
    %p182 = scmp.eq.s32.totalorder %s19, 1
    %p183 = por %p181, %p182
    %p185 = scmp.ne.s32.totalorder %s168, %s184
    %p186 = scmp.eq.s32.totalorder %s19, 0
    %p187 = por %p185, %p186
    %p188 = scmp.le.s32.totalorder 1, %s13
    %p189 = scmp.lt.s32.totalorder %s13, 3
    %p190 = pnand %p188, %p189
    %p191 = pneg %p190
    // Predicated region
    $region9: #{_forward.3} parent=5 // pred_check
      _
    $region10: #{_forward.3} parent=5 // pred_check_branch
      %193 = sbr.rel (%p190) target = $region12
    $region11: #{_forward.3} parent=5 // pred_region
      %s194 = ssub.s32 %s13, 1
      // Predicated region
      $region13: #{_forward.3} parent=11 // pred_check
        %p195 = pneg %p60
      $region14: #{_forward.3} parent=11 // pred_check_branch
        %197 = sbr.rel (%p195) target = $region16
      $region15: #{_forward.3} parent=11 // pred_region
        _
      $region16: #{_forward.3} parent=11 // pred_fallthru
        _
      // Predicated region
      $region17: #{_forward.3} parent=11 // pred_check
        %p198 = pneg %p81
      $region18: #{_forward.3} parent=11 // pred_check_branch
        %200 = sbr.rel (%p198) target = $region20
      $region19: #{_forward.3} parent=11 // pred_region
        _
      $region20: #{_forward.3} parent=11 // pred_fallthru
        _
      // Predicated region
      $region21: #{_forward.3} parent=11 // pred_check
        %p201 = pneg %p102
      $region22: #{_forward.3} parent=11 // pred_check_branch
        %203 = sbr.rel (%p201) target = $region24
      $region23: #{_forward.3} parent=11 // pred_region
        _
      $region24: #{_forward.3} parent=11 // pred_fallthru
        _
    $region12: #{_forward.3} parent=5 // pred_fallthru
      _
    %p204 = scmp.lt.s32.totalorder %s13, 2
    // Predicated region
    $region25: #{_forward.3} parent=5 // pred_check
      %p205 = pneg %p204
    $region26: #{_forward.3} parent=5 // pred_check_branch
      %207 = sbr.rel (%p205) target = $region28
    $region27: #{_forward.3} parent=5 // pred_region
      // Predicated region
      $region29: #{_forward.3} parent=27 // pred_check
        %p208 = pneg %p33
      $region30: #{_forward.3} parent=27 // pred_check_branch
        %210 = sbr.rel (%p208) target = $region32
      $region31: #{_forward.3} parent=27 // pred_region
        %p211 = scmp.lt.s32.totalorder %s13, 1
        %s212 = scalar_select %p211, %s13, 1
        %s213 = smul.addr %s212, 4
        %s214 = scalar_lea.vmem %s0, %s213
      $region32: #{_forward.3} parent=27 // pred_fallthru
        _
    $region28: #{_forward.3} parent=5 // pred_fallthru
      _
    %p215 = scmp.le.s32.totalorder 1, %s13
    %p216 = scmp.lt.s32.totalorder %s13, 3
    %p217 = pnand %p215, %p216
    %p218 = pneg %p217
    // Predicated region
    $region33: #{_forward.3} parent=5 // pred_check
      _
    $region34: #{_forward.3} parent=5 // pred_check_branch
      %220 = sbr.rel (%p217) target = $region36
    $region35: #{_forward.3} parent=5 // pred_region
      %s221 = ssub.s32 %s13, 1
      %p222 = scmp.lt.s32.totalorder %s18, 1
      %s223 = scalar_select %p222, %s18, 1
      %s224 = smul.addr %s223, 4
      %s225 = scalar_lea.vmem %s0, %s224
      %p226 = pneg %p39
      %p227 = pneg %p36
      %p228 = pneg %p60
      %p229 = pneg %p57
      %p230 = pneg %p81
      %p231 = pneg %p78
      %p232 = pneg %p102
      %p233 = pneg %p99
      %p234 = pneg %p128
      %p235 = pneg %p125
      %p236 = scmp.lt.s32.totalorder %s18, 1
      %s237 = scalar_select %p236, %s18, 1
      %s238 = smul.addr %s237, 2
      %s239 = smul.addr %s238, 4
      %s240 = scalar_lea.vmem %s4, %s239
      %p241 = pneg %p154
      %p242 = pneg %p151
      %p243 = scmp.lt.s32.totalorder %s18, 1
      %s244 = scalar_select %p243, %s18, 1
      %s245 = smul.addr %s244, 2
      %s246 = smul.addr %s245, 8
      %s247 = scalar_lea.vmem %s5, %s246
      %p248 = pneg %p180
      %p249 = pneg %p177
      %p250 = scmp.lt.s32.totalorder %s18, 1
      %s251 = scalar_select %p250, %s18, 1
      %s252 = smul.addr %s251, 2
      %s253 = smul.addr %s252, 8
      %s254 = scalar_lea.vmem %s6, %s253
      %p255 = scmp.lt.s32.totalorder %s18, 1
      %s256 = scalar_select %p255, %s18, 1
      %s257 = smul.addr %s256, 4
      %s258 = scalar_lea.vmem %s0, %s257
      %p259 = scmp.lt.s32.totalorder %s18, 1
      %s260 = scalar_select %p259, %s18, 1
      %s261 = smul.addr %s260, 2
      %s262 = smul.addr %s261, 4
      %s263 = scalar_lea.vmem %s4, %s262
      %p264 = scmp.lt.s32.totalorder %s18, 1
      %s265 = scalar_select %p264, %s18, 1
      %s266 = smul.addr %s265, 2
      %s267 = smul.addr %s266, 8
      %s268 = scalar_lea.vmem %s5, %s267
      %p269 = scmp.lt.s32.totalorder %s18, 1
      %s270 = scalar_select %p269, %s18, 1
      %s271 = smul.addr %s270, 2
      %s272 = smul.addr %s271, 8
      %s273 = scalar_lea.vmem %s6, %s272
      %v275 = vld [vmem:[%s258] sm:$0xf]
      %v276 = vld [vmem:[%s1] sm:$0xf]
      %vm277 = vcmask 64512
      %v279 = vsel %vm277, %v275, 0
      %vm281 = vcmask 1043456
      %v283 = vsel %vm281, %v276, 0
      %285 = vmatprep.subr.bf16.mxu0 0
      %286 = vmatpush1.bf16.msra.mxu0 %v283
      %287 = vmatprep.subr.bf16.mxu0 0
      %288 = vmatpush1.bf16.msra.mxu0 0
      %289 = vmatprep.subr.bf16.mxu0 0
      %290 = vmatpush1.bf16.msra.mxu0 0
      %291 = vmatprep.subr.bf16.mxu0 0
      %292 = vmatpush1.bf16.msra.mxu0 0
      %293 = vmatprep.subr.bf16.mxu0 0
      %294 = vmatpush1.bf16.msra.mxu0 0
      %295 = vmatprep.subr.bf16.mxu0 0
      %296 = vmatpush1.bf16.msra.mxu0 0
      %297 = vmatprep.subr.bf16.mxu0 0
      %298 = vmatpush1.bf16.msra.mxu0 0
      %299 = vmatprep.subr.bf16.mxu0 0
      %300 = vmatpush1.bf16.msra.mxu0 0
      %301 = vmatprep.subr.bf16.mxu0 0
      %302 = vmatpush1.bf16.msra.mxu0 0
      %303 = vmatprep.subr.bf16.mxu0 0
      %304 = vmatpush1.bf16.msra.mxu0 0
      %305 = vmatprep.subr.bf16.mxu0 0
      %306 = vmatpush1.bf16.msra.mxu0 0
      %307 = vmatprep.subr.bf16.mxu0 0
      %308 = vmatpush1.bf16.msra.mxu0 0
      %309 = vmatprep.subr.bf16.mxu0 0
      %310 = vmatpush1.bf16.msra.mxu0 0
      %311 = vmatprep.subr.bf16.mxu0 0
      %312 = vmatpush1.bf16.msra.mxu0 0
      %313 = vmatprep.subr.bf16.mxu0 0
      %314 = vmatpush1.bf16.msra.mxu0 0
      %315 = vmatprep.subr.bf16.mxu0 0
      %316 = vmatpush1.bf16.msra.mxu0 0
      %317 = vmatprep.mubr.bf16.mxu0 0
      %318 = vmatmul.mubr.bf16.gmra.mrb[0].mxu0 %v279
      %v319 = vpop.f32.mrb[0].mxu0
      %v320 = vadd.f32 0.0, %v319
      %v321 = vpop.f32.mrb[0].mxu0
      %v322 = vpop.f32.mrb[0].mxu0
      %v323 = vpop.f32.mrb[0].mxu0
      %324 = vdwg.mxu0
      %v325 = vpack.c.bf16 %v320, %v320
      %327 = vrot.lane.b32.xlu0 %v325, 1
      %v328 = vpop.permute.xlu0 %327
      %vm329 = vcmask 7168
      %v332 = vsel %vm329, 0, %v328
      %333 = vrot.lane.b32.xlu0 %v325, 127
      %v334 = vpop.permute.xlu0 %333
      %vm335 = vcmask 121856
      %v337 = vsel %vm335, %v334, 0
      %v338 = vld [vmem:[%s2] sm:$0xf]
      %v339 = vld [vmem:[%s2 + $0x4] sm:$0xf]
      %v340 = vld [vmem:[%s2 + $0x8] sm:$0xf]
      %v341 = vld [vmem:[%s2 + $0xc] sm:$0xf]
      %v342 = vld [vmem:[%s2 + $0x10] sm:$0xf]
      %v343 = vld [vmem:[%s2 + $0x14] sm:$0xf]
      %v344 = vld [vmem:[%s3] sm:$0xff]
      %v345 = vld [vmem:[%s3 + $0x8] sm:$0xff]
      %v348 = vunpack.c.l.b16 %v340
      %v349 = vunpack.c.l.b16 %v341
      %v350 = vpack.c.b16 %v349, %v348
      %v352 = vsel %vm277, %v350, 0
      %v355 = vsel %vm281, %v325, 0
      %357 = vmatprep.subr.bf16.mxu0 0
      %358 = vmatpush1.bf16.msra.mxu0 %v355
      %359 = vmatprep.subr.bf16.mxu0 0
      %360 = vmatpush1.bf16.msra.mxu0 0
      %361 = vmatprep.subr.bf16.mxu0 0
      %362 = vmatpush1.bf16.msra.mxu0 0
      %363 = vmatprep.subr.bf16.mxu0 0
      %364 = vmatpush1.bf16.msra.mxu0 0
      %365 = vmatprep.subr.bf16.mxu0 0
      %366 = vmatpush1.bf16.msra.mxu0 0
      %367 = vmatprep.subr.bf16.mxu0 0
      %368 = vmatpush1.bf16.msra.mxu0 0
      %369 = vmatprep.subr.bf16.mxu0 0
      %370 = vmatpush1.bf16.msra.mxu0 0
      %371 = vmatprep.subr.bf16.mxu0 0
      %372 = vmatpush1.bf16.msra.mxu0 0
      %373 = vmatprep.subr.bf16.mxu0 0
      %374 = vmatpush1.bf16.msra.mxu0 0
      %375 = vmatprep.subr.bf16.mxu0 0
      %376 = vmatpush1.bf16.msra.mxu0 0
      %377 = vmatprep.subr.bf16.mxu0 0
      %378 = vmatpush1.bf16.msra.mxu0 0
      %379 = vmatprep.subr.bf16.mxu0 0
      %380 = vmatpush1.bf16.msra.mxu0 0
      %381 = vmatprep.subr.bf16.mxu0 0
      %382 = vmatpush1.bf16.msra.mxu0 0
      %383 = vmatprep.subr.bf16.mxu0 0
      %384 = vmatpush1.bf16.msra.mxu0 0
      %385 = vmatprep.subr.bf16.mxu0 0
      %386 = vmatpush1.bf16.msra.mxu0 0
      %387 = vmatprep.subr.bf16.mxu0 0
      %388 = vmatpush1.bf16.msra.mxu0 0
      %389 = vmatprep.mubr.bf16.mxu0 0
      %390 = vmatmul.mubr.bf16.gmra.mrb[0].mxu0 %v352
      %v391 = vpop.f32.mrb[0].mxu0
      %v392 = vadd.f32 0.0, %v391
      %v393 = vpop.f32.mrb[0].mxu0
      %v394 = vpop.f32.mrb[0].mxu0
      %v395 = vadd.f32 0.0, %v394
      %v396 = vpop.f32.mrb[0].mxu0
      %397 = vdwg.mxu0
      %v400 = vunpack.c.l.b16 %v338
      %v401 = vunpack.c.l.b16 %v339
      %v402 = vpack.c.b16 %v401, %v400
      %v404 = vsel %vm277, %v402, 0
      %v406 = vsel %vm281, %v332, 0
      %408 = vmatprep.subr.bf16.mxu0 0
      %409 = vmatpush1.bf16.msra.mxu0 %v406
      %410 = vmatprep.subr.bf16.mxu0 0
      %411 = vmatpush1.bf16.msra.mxu0 0
      %412 = vmatprep.subr.bf16.mxu0 0
      %413 = vmatpush1.bf16.msra.mxu0 0
      %414 = vmatprep.subr.bf16.mxu0 0
      %415 = vmatpush1.bf16.msra.mxu0 0
      %416 = vmatprep.subr.bf16.mxu0 0
      %417 = vmatpush1.bf16.msra.mxu0 0
      %418 = vmatprep.subr.bf16.mxu0 0
      %419 = vmatpush1.bf16.msra.mxu0 0
      %420 = vmatprep.subr.bf16.mxu0 0
      %421 = vmatpush1.bf16.msra.mxu0 0
      %422 = vmatprep.subr.bf16.mxu0 0
      %423 = vmatpush1.bf16.msra.mxu0 0
      %424 = vmatprep.subr.bf16.mxu0 0
      %425 = vmatpush1.bf16.msra.mxu0 0
      %426 = vmatprep.subr.bf16.mxu0 0
      %427 = vmatpush1.bf16.msra.mxu0 0
      %428 = vmatprep.subr.bf16.mxu0 0
      %429 = vmatpush1.bf16.msra.mxu0 0
      %430 = vmatprep.subr.bf16.mxu0 0
      %431 = vmatpush1.bf16.msra.mxu0 0
      %432 = vmatprep.subr.bf16.mxu0 0
      %433 = vmatpush1.bf16.msra.mxu0 0
      %434 = vmatprep.subr.bf16.mxu0 0
      %435 = vmatpush1.bf16.msra.mxu0 0
      %436 = vmatprep.subr.bf16.mxu0 0
      %437 = vmatpush1.bf16.msra.mxu0 0
      %438 = vmatprep.subr.bf16.mxu0 0
      %439 = vmatpush1.bf16.msra.mxu0 0
      %440 = vmatprep.mubr.bf16.mxu0 0
      %441 = vmatmul.mubr.bf16.gmra.mrb[0].mxu0 %v404
      %v442 = vpop.f32.mrb[0].mxu0
      %v443 = vadd.f32 %v392, %v442
      %v444 = vpop.f32.mrb[0].mxu0
      %v445 = vpop.f32.mrb[0].mxu0
      %v446 = vadd.f32 %v395, %v445
      %v447 = vpop.f32.mrb[0].mxu0
      %448 = vdwg.mxu0
      %v451 = vunpack.c.l.b16 %v342
      %v452 = vunpack.c.l.b16 %v343
      %v453 = vpack.c.b16 %v452, %v451
      %v455 = vsel %vm277, %v453, 0
      %v457 = vsel %vm281, %v337, 0
      %459 = vmatprep.subr.bf16.mxu0 0
      %460 = vmatpush1.bf16.msra.mxu0 %v457
      %461 = vmatprep.subr.bf16.mxu0 0
      %462 = vmatpush1.bf16.msra.mxu0 0
      %463 = vmatprep.subr.bf16.mxu0 0
      %464 = vmatpush1.bf16.msra.mxu0 0
      %465 = vmatprep.subr.bf16.mxu0 0
      %466 = vmatpush1.bf16.msra.mxu0 0
      %467 = vmatprep.subr.bf16.mxu0 0
      %468 = vmatpush1.bf16.msra.mxu0 0
      %469 = vmatprep.subr.bf16.mxu0 0
      %470 = vmatpush1.bf16.msra.mxu0 0
      %471 = vmatprep.subr.bf16.mxu0 0
      %472 = vmatpush1.bf16.msra.mxu0 0
      %473 = vmatprep.subr.bf16.mxu0 0
      %474 = vmatpush1.bf16.msra.mxu0 0
      %475 = vmatprep.subr.bf16.mxu0 0
      %476 = vmatpush1.bf16.msra.mxu0 0
      %477 = vmatprep.subr.bf16.mxu0 0
      %478 = vmatpush1.bf16.msra.mxu0 0
      %479 = vmatprep.subr.bf16.mxu0 0
      %480 = vmatpush1.bf16.msra.mxu0 0
      %481 = vmatprep.subr.bf16.mxu0 0
      %482 = vmatpush1.bf16.msra.mxu0 0
      %483 = vmatprep.subr.bf16.mxu0 0
      %484 = vmatpush1.bf16.msra.mxu0 0
      %485 = vmatprep.subr.bf16.mxu0 0
      %486 = vmatpush1.bf16.msra.mxu0 0
      %487 = vmatprep.subr.bf16.mxu0 0
      %488 = vmatpush1.bf16.msra.mxu0 0
      %489 = vmatprep.subr.bf16.mxu0 0
      %490 = vmatpush1.bf16.msra.mxu0 0
      %491 = vmatprep.mubr.bf16.mxu0 0
      %492 = vmatmul.mubr.bf16.gmra.mrb[0].mxu0 %v455
      %v493 = vpop.f32.mrb[0].mxu0
      %v494 = vadd.f32 0.0, %v493
      %v495 = vpop.f32.mrb[0].mxu0
      %v496 = vpop.f32.mrb[0].mxu0
      %v497 = vadd.f32 0.0, %v496
      %v498 = vpop.f32.mrb[0].mxu0
      %499 = vdwg.mxu0
      %v500 = vadd.f32 %v443, %v494
      %v501 = vadd.f32 %v446, %v497
      %503 = vset.pattern.permute.xlu0 0
      %504 = vperm.xlu0 %503, %v344
      %v505 = vpop.permute.xlu0 %504
      %508 = vset.pattern.permute.xlu0 0
      %509 = vperm.xlu0 %508, %v345
      %v510 = vpop.permute.xlu0 %509
      %v512 = vadd.f32 %v500, %v505
      %v513 = vadd.f32 %v501, %v510
      %v514 = vpack.c.bf16 %v513, %v512
      %v516 = vunpack.c.l.b16 %v514
      %v517 = vunpack.c.h.b16 %v514
      %v518 = vpack.c.b16 %v516, %v516
      %v519 = vpack.c.b16 %v517, %v517
      %vm522 = vcmask 125952
      %523 = vst.msk [vmem:[%s263] sm:$0xf] %vm522, %v518
      %524 = vst.msk [vmem:[%s263 + $0x4] sm:$0xf] %vm522, %v519
      %vm525 = vcmask 130048
      %v526 = vsel %vm525, %v512, 0.0
      %527 = vadd.xlane.f32.xlu0 %v526
      %v528 = vpop.xlane.xlu0 %527
      %v529 = vsel %vm525, %v513, 0.0
      %530 = vadd.xlane.f32.xlu0 %v529
      %v531 = vpop.xlane.xlu0 %530
      %v532 = vadd.f32 %v528, 0.0
      %v533 = vadd.f32 %v531, 0.0
      %v534 = vmul.f32 %v512, %v512
      %v535 = vmul.f32 %v513, %v513
      %v536 = vsel %vm525, %v534, 0.0
      %537 = vadd.xlane.f32.xlu0 %v536
      %v538 = vpop.xlane.xlu0 %537
      %v539 = vsel %vm525, %v535, 0.0
      %540 = vadd.xlane.f32.xlu0 %v539
      %v541 = vpop.xlane.xlu0 %540
      %v542 = vadd.f32 %v538, 0.0
      %v543 = vadd.f32 %v541, 0.0
      %544 = vst.msk [vmem:[%s268] sm:$0xff] %vm329, %v532
      %545 = vst.msk [vmem:[%s268 + $0x8] sm:$0xff] %vm329, %v533
      %546 = vst.msk [vmem:[%s273] sm:$0xff] %vm329, %v542
      %547 = vst.msk [vmem:[%s273 + $0x8] sm:$0xff] %vm329, %v543
      %p548 = scmp.lt.s32.totalorder %s18, 1
      %s549 = scalar_select %p548, %s18, 1
      %s550 = smul.addr %s549, 2
      %s551 = smul.addr %s550, 4
      %s552 = scalar_lea.vmem %s4, %s551
      %p553 = scmp.lt.s32.totalorder %s18, 1
      %s554 = scalar_select %p553, %s18, 1
      %s555 = smul.addr %s554, 2
      %s556 = smul.addr %s555, 8
      %s557 = scalar_lea.vmem %s5, %s556
      %p558 = scmp.lt.s32.totalorder %s18, 1
      %s559 = scalar_select %p558, %s18, 1
      %s560 = smul.addr %s559, 2
      %s561 = smul.addr %s560, 8
      %s562 = scalar_lea.vmem %s6, %s561
      // Predicated region
      $region37: #{_forward.3} parent=35 // pred_check
        %p563 = pneg %p125
      $region38: #{_forward.3} parent=35 // pred_check_branch
        %565 = sbr.rel (%p563) target = $region40
      $region39: #{_forward.3} parent=35 // pred_region
        _
      $region40: #{_forward.3} parent=35 // pred_fallthru
        _
      // Predicated region
      $region41: #{_forward.3} parent=35 // pred_check
        %p566 = pneg %p151
      $region42: #{_forward.3} parent=35 // pred_check_branch
        %568 = sbr.rel (%p566) target = $region44
      $region43: #{_forward.3} parent=35 // pred_region
        _
      $region44: #{_forward.3} parent=35 // pred_fallthru
        _
      // Predicated region
      $region45: #{_forward.3} parent=35 // pred_check
        %p569 = pneg %p177
      $region46: #{_forward.3} parent=35 // pred_check_branch
        %571 = sbr.rel (%p569) target = $region48
      $region47: #{_forward.3} parent=35 // pred_region
        _
      $region48: #{_forward.3} parent=35 // pred_fallthru
        _
    $region36: #{_forward.3} parent=5 // pred_fallthru
      _
    %p572 = scmp.le.s32.totalorder 2, %s13
    // Predicated region
    $region49: #{_forward.3} parent=5 // pred_check
      %p573 = pneg %p572
    $region50: #{_forward.3} parent=5 // pred_check_branch
      %575 = sbr.rel (%p573) target = $region52
    $region51: #{_forward.3} parent=5 // pred_region
      %s576 = ssub.s32 %s13, 2
      // Predicated region
      $region53: #{_forward.3} parent=51 // pred_check
        %p577 = pneg %p131
      $region54: #{_forward.3} parent=51 // pred_check_branch
        %579 = sbr.rel (%p577) target = $region56
      $region55: #{_forward.3} parent=51 // pred_region
        %p580 = scmp.lt.s32.totalorder %s19, 1
        %s581 = scalar_select %p580, %s19, 1
        %s582 = smul.addr %s581, 2
        %s583 = smul.addr %s582, 4
        %s584 = scalar_lea.vmem %s4, %s583
      $region56: #{_forward.3} parent=51 // pred_fallthru
        _
      // Predicated region
      $region57: #{_forward.3} parent=51 // pred_check
        %p585 = pneg %p157
      $region58: #{_forward.3} parent=51 // pred_check_branch
        %587 = sbr.rel (%p585) target = $region60
      $region59: #{_forward.3} parent=51 // pred_region
        %p588 = scmp.lt.s32.totalorder %s19, 1
        %s589 = scalar_select %p588, %s19, 1
        %s590 = smul.addr %s589, 2
        %s591 = smul.addr %s590, 8
        %s592 = scalar_lea.vmem %s5, %s591
      $region60: #{_forward.3} parent=51 // pred_fallthru
        _
      // Predicated region
      $region61: #{_forward.3} parent=51 // pred_check
        %p593 = pneg %p183
      $region62: #{_forward.3} parent=51 // pred_check_branch
        %595 = sbr.rel (%p593) target = $region64
      $region63: #{_forward.3} parent=51 // pred_region
        %p596 = scmp.lt.s32.totalorder %s19, 1
        %s597 = scalar_select %p596, %s19, 1
        %s598 = smul.addr %s597, 2
        %s599 = smul.addr %s598, 8
        %s600 = scalar_lea.vmem %s6, %s599
      $region64: #{_forward.3} parent=51 // pred_fallthru
        _
    $region52: #{_forward.3} parent=5 // pred_fallthru
      _
  $region6: #{_forward.3} parent=0 // loop_footer
    %s17 = sadd.s32 1, %s13
  $region7: #{_forward.3} parent=0 // loop_footer_branch
    %12 = sbr.rel target = $region3
  $region8: #{_forward.3} parent=0 // loop_exit
    _

// kernel: _forward.4
$region0: #{_forward.4}
  #allocation0 [shape = 'u32[]', space=smem, size = 0x4, offset = 0x4, fixed_abs, tag = 'smem constant byte address 0x4 - core index']
  #allocation1 [shape = 'u32[144,128]{1,0:T(1,128)}', space=vmem, size = 0x12000, scoped, tag = 'internal scratch']
  %s0 = inlined_call_operand.vmem [shape: bf16[2,16,16], index: 0, kind: input, shape index: {}]
  %s1 = inlined_call_operand.vmem [shape: f32[16,1], index: 1, kind: input, shape index: {}]
  %s2 = inlined_call_operand.vmem [shape: f32[16,1], index: 2, kind: input, shape index: {}]
  %s3 = inlined_call_operand.vmem [shape: bf16[16,32], index: 3, kind: input, shape index: {}]
  %s4 = inlined_call_operand.vmem [shape: bf16[3,8,16], index: 4, kind: input, shape index: {}]
  %s5 = inlined_call_operand.vmem [shape: f32[8,1], index: 5, kind: input, shape index: {}]
  %s6 = inlined_call_operand.vmem [shape: bf16[2,8,32], index: 6, kind: output, shape index: {0}]
  %s7 = inlined_call_operand.vmem [shape: f32[2,8,1], index: 7, kind: output, shape index: {1}]
  %s8 = inlined_call_operand.vmem [shape: f32[2,8,1], index: 8, kind: output, shape index: {2}]
  %9 = xla_tuple %s6, %s7, %s8
  %s10 = sld [smem:[#allocation0]]
  $region73: #{_forward.4} parent=0
    _
  %s12 = ssub.s32 1, %s10
  %s13 = scalar_select 0, %s12, %s10
  loop: start=0, step=1, limit=4
  $region2: #{_forward.4} parent=0 // loop_pre_header
    _
  $region3: #{_forward.4} parent=0 // loop_header
    %s15 = sphi 0, %s19
    %p16 = scmp.ge.s32.totalorder %s15, 4
    %s25 = sphi 0, %s27
    %s28 = sphi 0, %s25
    %s29 = sphi 0, %s28
    %s45 = sphi 0, %s29
    %s49 = sphi 0, %s49
    %s51 = sphi 0, %s49
    %s52 = sphi 0, %s51
    %s66 = sphi 0, %s52
    %s70 = sphi 0, %s70
    %s72 = sphi 0, %s70
    %s73 = sphi 0, %s72
    %s87 = sphi 0, %s73
    %s91 = sphi 0, %s91
    %s93 = sphi 0, %s91
    %s94 = sphi 0, %s93
    %s108 = sphi 0, %s94
    %s112 = sphi 0, %s112
    %s114 = sphi 0, %s112
    %s115 = sphi 0, %s114
    %s129 = sphi 0, %s115
    %s133 = sphi 0, %s133
    %s135 = sphi 0, %s133
    %s136 = sphi 0, %s135
    %s150 = sphi 0, %s136
    %s156 = sphi 0, %s158
    %s159 = sphi 0, %s156
    %s160 = sphi 0, %s159
    %s176 = sphi 0, %s160
    %s182 = sphi 0, %s184
    %s185 = sphi 0, %s182
    %s186 = sphi 0, %s185
    %s202 = sphi 0, %s186
    %s208 = sphi 0, %s210
    %s211 = sphi 0, %s208
    %s212 = sphi 0, %s211
    %s228 = sphi 0, %s212
  $region4: #{_forward.4} parent=0 // loop_header_branch
    %18 = sbr.rel (%p16) target = $region8
  $region5: #{_forward.4} parent=0 // loop_body
    %s20 = ssub.s32 %s15, 1
    %s21 = ssub.s32 %s15, 2
    %s22 = sadd.s32 %s15, 1
    %s23 = ssub.s32 %s15, %s22
    %p24 = scmp.eq.s32.totalorder %s23, 0
    %s26 = sadd.s32 %s25, 1
    %s27 = scalar_select %p24, %s25, %s26
    %p30 = pneg %p24
    %p31 = scmp.eq.s32.totalorder %s15, 1
    %p32 = por %p30, %p31
    %p33 = scmp.ne.s32.totalorder %s25, %s28
    %p34 = scmp.eq.s32.totalorder %s15, 0
    %p35 = por %p33, %p34
    %p36 = scmp.ne.s32.totalorder %s25, %s28
    %p37 = scmp.eq.s32.totalorder %s20, 1
    %p38 = por %p36, %p37
    %p39 = scmp.ne.s32.totalorder %s28, %s29
    %p40 = scmp.eq.s32.totalorder %s20, 0
    %p41 = por %p39, %p40
    %p42 = scmp.ne.s32.totalorder %s28, %s29
    %p43 = scmp.eq.s32.totalorder %s21, 1
    %p44 = por %p42, %p43
    %p46 = scmp.ne.s32.totalorder %s29, %s45
    %p47 = scmp.eq.s32.totalorder %s21, 0
    %p48 = por %p46, %p47
    %s50 = sadd.s32 %s49, 1
    %p53 = scmp.eq.s32.totalorder %s15, 1
    %p54 = scmp.ne.s32.totalorder %s49, %s51
    %p55 = scmp.eq.s32.totalorder %s15, 0
    %p56 = por %p54, %p55
    %p57 = scmp.ne.s32.totalorder %s49, %s51
    %p58 = scmp.eq.s32.totalorder %s20, 1
    %p59 = por %p57, %p58
    %p60 = scmp.ne.s32.totalorder %s51, %s52
    %p61 = scmp.eq.s32.totalorder %s20, 0
    %p62 = por %p60, %p61
    %p63 = scmp.ne.s32.totalorder %s51, %s52
    %p64 = scmp.eq.s32.totalorder %s21, 1
    %p65 = por %p63, %p64
    %p67 = scmp.ne.s32.totalorder %s52, %s66
    %p68 = scmp.eq.s32.totalorder %s21, 0
    %p69 = por %p67, %p68
    %s71 = sadd.s32 %s70, 1
    %p74 = scmp.eq.s32.totalorder %s15, 1
    %p75 = scmp.ne.s32.totalorder %s70, %s72
    %p76 = scmp.eq.s32.totalorder %s15, 0
    %p77 = por %p75, %p76
    %p78 = scmp.ne.s32.totalorder %s70, %s72
    %p79 = scmp.eq.s32.totalorder %s20, 1
    %p80 = por %p78, %p79
    %p81 = scmp.ne.s32.totalorder %s72, %s73
    %p82 = scmp.eq.s32.totalorder %s20, 0
    %p83 = por %p81, %p82
    %p84 = scmp.ne.s32.totalorder %s72, %s73
    %p85 = scmp.eq.s32.totalorder %s21, 1
    %p86 = por %p84, %p85
    %p88 = scmp.ne.s32.totalorder %s73, %s87
    %p89 = scmp.eq.s32.totalorder %s21, 0
    %p90 = por %p88, %p89
    %s92 = sadd.s32 %s91, 1
    %p95 = scmp.eq.s32.totalorder %s15, 1
    %p96 = scmp.ne.s32.totalorder %s91, %s93
    %p97 = scmp.eq.s32.totalorder %s15, 0
    %p98 = por %p96, %p97
    %p99 = scmp.ne.s32.totalorder %s91, %s93
    %p100 = scmp.eq.s32.totalorder %s20, 1
    %p101 = por %p99, %p100
    %p102 = scmp.ne.s32.totalorder %s93, %s94
    %p103 = scmp.eq.s32.totalorder %s20, 0
    %p104 = por %p102, %p103
    %p105 = scmp.ne.s32.totalorder %s93, %s94
    %p106 = scmp.eq.s32.totalorder %s21, 1
    %p107 = por %p105, %p106
    %p109 = scmp.ne.s32.totalorder %s94, %s108
    %p110 = scmp.eq.s32.totalorder %s21, 0
    %p111 = por %p109, %p110
    %s113 = sadd.s32 %s112, 1
    %p116 = scmp.eq.s32.totalorder %s15, 1
    %p117 = scmp.ne.s32.totalorder %s112, %s114
    %p118 = scmp.eq.s32.totalorder %s15, 0
    %p119 = por %p117, %p118
    %p120 = scmp.ne.s32.totalorder %s112, %s114
    %p121 = scmp.eq.s32.totalorder %s20, 1
    %p122 = por %p120, %p121
    %p123 = scmp.ne.s32.totalorder %s114, %s115
    %p124 = scmp.eq.s32.totalorder %s20, 0
    %p125 = por %p123, %p124
    %p126 = scmp.ne.s32.totalorder %s114, %s115
    %p127 = scmp.eq.s32.totalorder %s21, 1
    %p128 = por %p126, %p127
    %p130 = scmp.ne.s32.totalorder %s115, %s129
    %p131 = scmp.eq.s32.totalorder %s21, 0
    %p132 = por %p130, %p131
    %s134 = sadd.s32 %s133, 1
    %p137 = scmp.eq.s32.totalorder %s15, 1
    %p138 = scmp.ne.s32.totalorder %s133, %s135
    %p139 = scmp.eq.s32.totalorder %s15, 0
    %p140 = por %p138, %p139
    %p141 = scmp.ne.s32.totalorder %s133, %s135
    %p142 = scmp.eq.s32.totalorder %s20, 1
    %p143 = por %p141, %p142
    %p144 = scmp.ne.s32.totalorder %s135, %s136
    %p145 = scmp.eq.s32.totalorder %s20, 0
    %p146 = por %p144, %p145
    %p147 = scmp.ne.s32.totalorder %s135, %s136
    %p148 = scmp.eq.s32.totalorder %s21, 1
    %p149 = por %p147, %p148
    %p151 = scmp.ne.s32.totalorder %s136, %s150
    %p152 = scmp.eq.s32.totalorder %s21, 0
    %p153 = por %p151, %p152
    %s154 = ssub.s32 %s15, %s22
    %p155 = scmp.eq.s32.totalorder %s154, 0
    %s157 = sadd.s32 %s156, 1
    %s158 = scalar_select %p155, %s156, %s157
    %p161 = pneg %p155
    %p162 = scmp.eq.s32.totalorder %s15, 1
    %p163 = por %p161, %p162
    %p164 = scmp.ne.s32.totalorder %s156, %s159
    %p165 = scmp.eq.s32.totalorder %s15, 0
    %p166 = por %p164, %p165
    %p167 = scmp.ne.s32.totalorder %s156, %s159
    %p168 = scmp.eq.s32.totalorder %s20, 1
    %p169 = por %p167, %p168
    %p170 = scmp.ne.s32.totalorder %s159, %s160
    %p171 = scmp.eq.s32.totalorder %s20, 0
    %p172 = por %p170, %p171
    %p173 = scmp.ne.s32.totalorder %s159, %s160
    %p174 = scmp.eq.s32.totalorder %s21, 1
    %p175 = por %p173, %p174
    %p177 = scmp.ne.s32.totalorder %s160, %s176
    %p178 = scmp.eq.s32.totalorder %s21, 0
    %p179 = por %p177, %p178
    %s180 = ssub.s32 %s15, %s22
    %p181 = scmp.eq.s32.totalorder %s180, 0
    %s183 = sadd.s32 %s182, 1
    %s184 = scalar_select %p181, %s182, %s183
    %p187 = pneg %p181
    %p188 = scmp.eq.s32.totalorder %s15, 1
    %p189 = por %p187, %p188
    %p190 = scmp.ne.s32.totalorder %s182, %s185
    %p191 = scmp.eq.s32.totalorder %s15, 0
    %p192 = por %p190, %p191
    %p193 = scmp.ne.s32.totalorder %s182, %s185
    %p194 = scmp.eq.s32.totalorder %s20, 1
    %p195 = por %p193, %p194
    %p196 = scmp.ne.s32.totalorder %s185, %s186
    %p197 = scmp.eq.s32.totalorder %s20, 0
    %p198 = por %p196, %p197
    %p199 = scmp.ne.s32.totalorder %s185, %s186
    %p200 = scmp.eq.s32.totalorder %s21, 1
    %p201 = por %p199, %p200
    %p203 = scmp.ne.s32.totalorder %s186, %s202
    %p204 = scmp.eq.s32.totalorder %s21, 0
    %p205 = por %p203, %p204
    %s206 = ssub.s32 %s15, %s22
    %p207 = scmp.eq.s32.totalorder %s206, 0
    %s209 = sadd.s32 %s208, 1
    %s210 = scalar_select %p207, %s208, %s209
    %p213 = pneg %p207
    %p214 = scmp.eq.s32.totalorder %s15, 1
    %p215 = por %p213, %p214
    %p216 = scmp.ne.s32.totalorder %s208, %s211
    %p217 = scmp.eq.s32.totalorder %s15, 0
    %p218 = por %p216, %p217
    %p219 = scmp.ne.s32.totalorder %s208, %s211
    %p220 = scmp.eq.s32.totalorder %s20, 1
    %p221 = por %p219, %p220
    %p222 = scmp.ne.s32.totalorder %s211, %s212
    %p223 = scmp.eq.s32.totalorder %s20, 0
    %p224 = por %p222, %p223
    %p225 = scmp.ne.s32.totalorder %s211, %s212
    %p226 = scmp.eq.s32.totalorder %s21, 1
    %p227 = por %p225, %p226
    %p229 = scmp.ne.s32.totalorder %s212, %s228
    %p230 = scmp.eq.s32.totalorder %s21, 0
    %p231 = por %p229, %p230
    %p232 = scmp.le.s32.totalorder 1, %s15
    %p233 = scmp.lt.s32.totalorder %s15, 3
    %p234 = pnand %p232, %p233
    %p235 = pneg %p234
    // Predicated region
    $region9: #{_forward.4} parent=5 // pred_check
      _
    $region10: #{_forward.4} parent=5 // pred_check_branch
      %237 = sbr.rel (%p234) target = $region12
    $region11: #{_forward.4} parent=5 // pred_region
      %s238 = ssub.s32 %s15, 1
      // Predicated region
      $region13: #{_forward.4} parent=11 // pred_check
        %p239 = pneg %p62
      $region14: #{_forward.4} parent=11 // pred_check_branch
        %241 = sbr.rel (%p239) target = $region16
      $region15: #{_forward.4} parent=11 // pred_region
        _
      $region16: #{_forward.4} parent=11 // pred_fallthru
        _
      // Predicated region
      $region17: #{_forward.4} parent=11 // pred_check
        %p242 = pneg %p83
      $region18: #{_forward.4} parent=11 // pred_check_branch
        %244 = sbr.rel (%p242) target = $region20
      $region19: #{_forward.4} parent=11 // pred_region
        _
      $region20: #{_forward.4} parent=11 // pred_fallthru
        _
      // Predicated region
      $region21: #{_forward.4} parent=11 // pred_check
        %p245 = pneg %p104
      $region22: #{_forward.4} parent=11 // pred_check_branch
        %247 = sbr.rel (%p245) target = $region24
      $region23: #{_forward.4} parent=11 // pred_region
        _
      $region24: #{_forward.4} parent=11 // pred_fallthru
        _
      // Predicated region
      $region25: #{_forward.4} parent=11 // pred_check
        %p248 = pneg %p125
      $region26: #{_forward.4} parent=11 // pred_check_branch
        %250 = sbr.rel (%p248) target = $region28
      $region27: #{_forward.4} parent=11 // pred_region
        _
      $region28: #{_forward.4} parent=11 // pred_fallthru
        _
      // Predicated region
      $region29: #{_forward.4} parent=11 // pred_check
        %p251 = pneg %p146
      $region30: #{_forward.4} parent=11 // pred_check_branch
        %253 = sbr.rel (%p251) target = $region32
      $region31: #{_forward.4} parent=11 // pred_region
        _
      $region32: #{_forward.4} parent=11 // pred_fallthru
        _
    $region12: #{_forward.4} parent=5 // pred_fallthru
      _
    %p254 = scmp.lt.s32.totalorder %s15, 2
    // Predicated region
    $region33: #{_forward.4} parent=5 // pred_check
      %p255 = pneg %p254
    $region34: #{_forward.4} parent=5 // pred_check_branch
      %257 = sbr.rel (%p255) target = $region36
    $region35: #{_forward.4} parent=5 // pred_region
      // Predicated region
      $region37: #{_forward.4} parent=35 // pred_check
        %p258 = pneg %p35
      $region38: #{_forward.4} parent=35 // pred_check_branch
        %260 = sbr.rel (%p258) target = $region40
      $region39: #{_forward.4} parent=35 // pred_region
        %p261 = scmp.lt.s32.totalorder %s15, 1
        %s262 = scalar_select %p261, %s15, 1
        %s263 = smul.addr %s262, 2
        %s264 = smul.addr %s263, 4
        %s265 = scalar_lea.vmem %s0, %s264
      $region40: #{_forward.4} parent=35 // pred_fallthru
        _
    $region36: #{_forward.4} parent=5 // pred_fallthru
      _
    %p266 = scmp.le.s32.totalorder 1, %s15
    %p267 = scmp.lt.s32.totalorder %s15, 3
    %p268 = pnand %p266, %p267
    %p269 = pneg %p268
    // Predicated region
    $region41: #{_forward.4} parent=5 // pred_check
      _
    $region42: #{_forward.4} parent=5 // pred_check_branch
      %271 = sbr.rel (%p268) target = $region44
    $region43: #{_forward.4} parent=5 // pred_region
      %s272 = ssub.s32 %s15, 1
      %p273 = scmp.lt.s32.totalorder %s20, 1
      %s274 = scalar_select %p273, %s20, 1
      %s275 = smul.addr %s274, 2
      %s276 = smul.addr %s275, 4
      %s277 = scalar_lea.vmem %s0, %s276
      %p278 = pneg %p41
      %p279 = pneg %p38
      %p280 = pneg %p62
      %p281 = pneg %p59
      %p282 = pneg %p83
      %p283 = pneg %p80
      %p284 = pneg %p104
      %p285 = pneg %p101
      %p286 = pneg %p125
      %p287 = pneg %p122
      %p288 = pneg %p146
      %p289 = pneg %p143
      %p290 = pneg %p172
      %p291 = pneg %p169
      %p292 = scmp.lt.s32.totalorder %s20, 1
      %s293 = scalar_select %p292, %s20, 1
      %s294 = smul.addr %s293, 4
      %s295 = scalar_lea.vmem %s6, %s294
      %p296 = pneg %p198
      %p297 = pneg %p195
      %p298 = scmp.lt.s32.totalorder %s20, 1
      %s299 = scalar_select %p298, %s20, 1
      %s300 = smul.addr %s299, 8
      %s301 = scalar_lea.vmem %s7, %s300
      %p302 = pneg %p224
      %p303 = pneg %p221
      %p304 = scmp.lt.s32.totalorder %s20, 1
      %s305 = scalar_select %p304, %s20, 1
      %s306 = smul.addr %s305, 8
      %s307 = scalar_lea.vmem %s8, %s306
      %p308 = scmp.lt.s32.totalorder %s20, 1
      %s309 = scalar_select %p308, %s20, 1
      %s310 = smul.addr %s309, 2
      %s311 = smul.addr %s310, 4
      %s312 = scalar_lea.vmem %s0, %s311
      %p313 = scmp.lt.s32.totalorder %s20, 1
      %s314 = scalar_select %p313, %s20, 1
      %s315 = smul.addr %s314, 4
      %s316 = scalar_lea.vmem %s6, %s315
      %p317 = scmp.lt.s32.totalorder %s20, 1
      %s318 = scalar_select %p317, %s20, 1
      %s319 = smul.addr %s318, 8
      %s320 = scalar_lea.vmem %s7, %s319
      %p321 = scmp.lt.s32.totalorder %s20, 1
      %s322 = scalar_select %p321, %s20, 1
      %s323 = smul.addr %s322, 8
      %s324 = scalar_lea.vmem %s8, %s323
      %v326 = vld [vmem:[%s312] sm:$0xf]
      %v327 = vld [vmem:[%s312 + $0x4] sm:$0xf]
      %v328 = vunpack.c.l.bf16 %v326
      %v329 = vunpack.c.l.bf16 %v327
      %v330 = vld [vmem:[%s1] sm:$0xff]
      %v331 = vld [vmem:[%s1 + $0x8] sm:$0xff]
      %333 = vset.pattern.permute.xlu0 0
      %334 = vperm.xlu0 %333, %v330
      %v335 = vpop.permute.xlu0 %334
      %338 = vset.pattern.permute.xlu0 0
      %339 = vperm.xlu0 %338, %v331
      %v340 = vpop.permute.xlu0 %339
      %v342 = vmul.f32 %v328, %v335
      %v343 = vmul.f32 %v329, %v340
      %v344 = vld [vmem:[%s2] sm:$0xff]
      %v345 = vld [vmem:[%s2 + $0x8] sm:$0xff]
      %347 = vset.pattern.permute.xlu0 0
      %348 = vperm.xlu0 %347, %v344
      %v349 = vpop.permute.xlu0 %348
      %352 = vset.pattern.permute.xlu0 0
      %353 = vperm.xlu0 %352, %v345
      %v354 = vpop.permute.xlu0 %353
      %v356 = vadd.f32 %v342, %v349
      %v357 = vadd.f32 %v343, %v354
      %vm358 = vcmp.ge.f32.partialorder %v356, 0.0
      %vm359 = vcmp.ge.f32.partialorder %v357, 0.0
      %v360 = vmul.f32 %v356, 0.2
      %v361 = vmul.f32 %v357, 0.2
      %v362 = vsel %vm358, %v356, %v360
      %v363 = vsel %vm359, %v357, %v361
      %v364 = vpack.c.bf16 %v363, %v362
      %v365 = vld [vmem:[%s3] sm:$0xf]
      %v366 = vld [vmem:[%s3 + $0x4] sm:$0xf]
      %v369 = vunpack.c.l.b16 %v365
      %v370 = vunpack.c.l.b16 %v366
      %v371 = vpack.c.b16 %v370, %v369
      %vm373 = vcmask 130048
      %v375 = vsel %vm373, %v364, 0
      %377 = vmatprep.subr.bf16.mxu0 0
      %378 = vmatpush1.bf16.msra.mxu0 %v371
      %379 = vmatprep.subr.bf16.mxu0 0
      %380 = vmatpush1.bf16.msra.mxu0 0
      %381 = vmatprep.subr.bf16.mxu0 0
      %382 = vmatpush1.bf16.msra.mxu0 0
      %383 = vmatprep.subr.bf16.mxu0 0
      %384 = vmatpush1.bf16.msra.mxu0 0
      %385 = vmatprep.subr.bf16.mxu0 0
      %386 = vmatpush1.bf16.msra.mxu0 0
      %387 = vmatprep.subr.bf16.mxu0 0
      %388 = vmatpush1.bf16.msra.mxu0 0
      %389 = vmatprep.subr.bf16.mxu0 0
      %390 = vmatpush1.bf16.msra.mxu0 0
      %391 = vmatprep.subr.bf16.mxu0 0
      %392 = vmatpush1.bf16.msra.mxu0 0
      %393 = vmatprep.subr.bf16.mxu0 0
      %394 = vmatpush1.bf16.msra.mxu0 0
      %395 = vmatprep.subr.bf16.mxu0 0
      %396 = vmatpush1.bf16.msra.mxu0 0
      %397 = vmatprep.subr.bf16.mxu0 0
      %398 = vmatpush1.bf16.msra.mxu0 0
      %399 = vmatprep.subr.bf16.mxu0 0
      %400 = vmatpush1.bf16.msra.mxu0 0
      %401 = vmatprep.subr.bf16.mxu0 0
      %402 = vmatpush1.bf16.msra.mxu0 0
      %403 = vmatprep.subr.bf16.mxu0 0
      %404 = vmatpush1.bf16.msra.mxu0 0
      %405 = vmatprep.subr.bf16.mxu0 0
      %406 = vmatpush1.bf16.msra.mxu0 0
      %407 = vmatprep.subr.bf16.mxu0 0
      %408 = vmatpush1.bf16.msra.mxu0 0
      %409 = vmatprep.mubr.bf16.mxu0 0
      %410 = vmatmul.mubr.bf16.gmra.mrb[0].mxu0 %v375
      %v411 = vpop.f32.mrb[0].mxu0
      %v412 = vadd.f32 0.0, %v411
      %v413 = vpop.f32.mrb[0].mxu0
      %v414 = vpop.f32.mrb[0].mxu0
      %v415 = vadd.f32 0.0, %v414
      %v416 = vpop.f32.mrb[0].mxu0
      %417 = vdwg.mxu0
      %v418 = vpack.c.bf16 %v415, %v412
      %420 = vrot.lane.b32.xlu0 %v418, 1
      %v421 = vpop.permute.xlu0 %420
      %vm422 = vcmask 7168
      %v425 = vsel %vm422, 0, %v421
      %427 = vrot.lane.b32.xlu0 %v418, 127
      %v428 = vpop.permute.xlu0 %427
      %vm429 = vcmask 252928
      %v431 = vsel %vm429, %v428, 0
      %v433 = vld [vmem:[%s4] sm:$0xf]
      %v434 = vld [vmem:[%s4 + $0x4] sm:$0xf]
      %v435 = vld [vmem:[%s4 + $0x8] sm:$0xf]
      %v436 = vld [vmem:[%s5] sm:$0xff]
      %v438 = vsel %vm373, %v434, 0
      %440 = vmatprep.subr.bf16.mxu0 0
      %441 = vmatpush1.bf16.msra.mxu0 %v418
      %442 = vmatprep.subr.bf16.mxu0 0
      %443 = vmatpush1.bf16.msra.mxu0 0
      %444 = vmatprep.subr.bf16.mxu0 0
      %445 = vmatpush1.bf16.msra.mxu0 0
      %446 = vmatprep.subr.bf16.mxu0 0
      %447 = vmatpush1.bf16.msra.mxu0 0
      %448 = vmatprep.subr.bf16.mxu0 0
      %449 = vmatpush1.bf16.msra.mxu0 0
      %450 = vmatprep.subr.bf16.mxu0 0
      %451 = vmatpush1.bf16.msra.mxu0 0
      %452 = vmatprep.subr.bf16.mxu0 0
      %453 = vmatpush1.bf16.msra.mxu0 0
      %454 = vmatprep.subr.bf16.mxu0 0
      %455 = vmatpush1.bf16.msra.mxu0 0
      %456 = vmatprep.subr.bf16.mxu0 0
      %457 = vmatpush1.bf16.msra.mxu0 0
      %458 = vmatprep.subr.bf16.mxu0 0
      %459 = vmatpush1.bf16.msra.mxu0 0
      %460 = vmatprep.subr.bf16.mxu0 0
      %461 = vmatpush1.bf16.msra.mxu0 0
      %462 = vmatprep.subr.bf16.mxu0 0
      %463 = vmatpush1.bf16.msra.mxu0 0
      %464 = vmatprep.subr.bf16.mxu0 0
      %465 = vmatpush1.bf16.msra.mxu0 0
      %466 = vmatprep.subr.bf16.mxu0 0
      %467 = vmatpush1.bf16.msra.mxu0 0
      %468 = vmatprep.subr.bf16.mxu0 0
      %469 = vmatpush1.bf16.msra.mxu0 0
      %470 = vmatprep.subr.bf16.mxu0 0
      %471 = vmatpush1.bf16.msra.mxu0 0
      %472 = vmatprep.mubr.bf16.mxu0 0
      %473 = vmatmul.mubr.bf16.gmra.mrb[0].mxu0 %v438
      %v474 = vpop.f32.mrb[0].mxu0
      %v475 = vadd.f32 0.0, %v474
      %v476 = vpop.f32.mrb[0].mxu0
      %v477 = vpop.f32.mrb[0].mxu0
      %v478 = vpop.f32.mrb[0].mxu0
      %479 = vdwg.mxu0
      %v481 = vsel %vm373, %v433, 0
      %483 = vmatprep.subr.bf16.mxu0 0
      %484 = vmatpush1.bf16.msra.mxu0 %v425
      %485 = vmatprep.subr.bf16.mxu0 0
      %486 = vmatpush1.bf16.msra.mxu0 0
      %487 = vmatprep.subr.bf16.mxu0 0
      %488 = vmatpush1.bf16.msra.mxu0 0
      %489 = vmatprep.subr.bf16.mxu0 0
      %490 = vmatpush1.bf16.msra.mxu0 0
      %491 = vmatprep.subr.bf16.mxu0 0
      %492 = vmatpush1.bf16.msra.mxu0 0
      %493 = vmatprep.subr.bf16.mxu0 0
      %494 = vmatpush1.bf16.msra.mxu0 0
      %495 = vmatprep.subr.bf16.mxu0 0
      %496 = vmatpush1.bf16.msra.mxu0 0
      %497 = vmatprep.subr.bf16.mxu0 0
      %498 = vmatpush1.bf16.msra.mxu0 0
      %499 = vmatprep.subr.bf16.mxu0 0
      %500 = vmatpush1.bf16.msra.mxu0 0
      %501 = vmatprep.subr.bf16.mxu0 0
      %502 = vmatpush1.bf16.msra.mxu0 0
      %503 = vmatprep.subr.bf16.mxu0 0
      %504 = vmatpush1.bf16.msra.mxu0 0
      %505 = vmatprep.subr.bf16.mxu0 0
      %506 = vmatpush1.bf16.msra.mxu0 0
      %507 = vmatprep.subr.bf16.mxu0 0
      %508 = vmatpush1.bf16.msra.mxu0 0
      %509 = vmatprep.subr.bf16.mxu0 0
      %510 = vmatpush1.bf16.msra.mxu0 0
      %511 = vmatprep.subr.bf16.mxu0 0
      %512 = vmatpush1.bf16.msra.mxu0 0
      %513 = vmatprep.subr.bf16.mxu0 0
      %514 = vmatpush1.bf16.msra.mxu0 0
      %515 = vmatprep.mubr.bf16.mxu0 0
      %516 = vmatmul.mubr.bf16.gmra.mrb[0].mxu0 %v481
      %v517 = vpop.f32.mrb[0].mxu0
      %v518 = vadd.f32 %v475, %v517
      %v519 = vpop.f32.mrb[0].mxu0
      %v520 = vpop.f32.mrb[0].mxu0
      %v521 = vpop.f32.mrb[0].mxu0
      %522 = vdwg.mxu0
      %v524 = vsel %vm373, %v435, 0
      %526 = vmatprep.subr.bf16.mxu0 0
      %527 = vmatpush1.bf16.msra.mxu0 %v431
      %528 = vmatprep.subr.bf16.mxu0 0
      %529 = vmatpush1.bf16.msra.mxu0 0
      %530 = vmatprep.subr.bf16.mxu0 0
      %531 = vmatpush1.bf16.msra.mxu0 0
      %532 = vmatprep.subr.bf16.mxu0 0
      %533 = vmatpush1.bf16.msra.mxu0 0
      %534 = vmatprep.subr.bf16.mxu0 0
      %535 = vmatpush1.bf16.msra.mxu0 0
      %536 = vmatprep.subr.bf16.mxu0 0
      %537 = vmatpush1.bf16.msra.mxu0 0
      %538 = vmatprep.subr.bf16.mxu0 0
      %539 = vmatpush1.bf16.msra.mxu0 0
      %540 = vmatprep.subr.bf16.mxu0 0
      %541 = vmatpush1.bf16.msra.mxu0 0
      %542 = vmatprep.subr.bf16.mxu0 0
      %543 = vmatpush1.bf16.msra.mxu0 0
      %544 = vmatprep.subr.bf16.mxu0 0
      %545 = vmatpush1.bf16.msra.mxu0 0
      %546 = vmatprep.subr.bf16.mxu0 0
      %547 = vmatpush1.bf16.msra.mxu0 0
      %548 = vmatprep.subr.bf16.mxu0 0
      %549 = vmatpush1.bf16.msra.mxu0 0
      %550 = vmatprep.subr.bf16.mxu0 0
      %551 = vmatpush1.bf16.msra.mxu0 0
      %552 = vmatprep.subr.bf16.mxu0 0
      %553 = vmatpush1.bf16.msra.mxu0 0
      %554 = vmatprep.subr.bf16.mxu0 0
      %555 = vmatpush1.bf16.msra.mxu0 0
      %556 = vmatprep.subr.bf16.mxu0 0
      %557 = vmatpush1.bf16.msra.mxu0 0
      %558 = vmatprep.mubr.bf16.mxu0 0
      %559 = vmatmul.mubr.bf16.gmra.mrb[0].mxu0 %v524
      %v560 = vpop.f32.mrb[0].mxu0
      %v561 = vadd.f32 0.0, %v560
      %v562 = vpop.f32.mrb[0].mxu0
      %v563 = vpop.f32.mrb[0].mxu0
      %v564 = vpop.f32.mrb[0].mxu0
      %565 = vdwg.mxu0
      %v566 = vadd.f32 %v518, %v561
      %568 = vset.pattern.permute.xlu0 0
      %569 = vperm.xlu0 %568, %v436
      %v570 = vpop.permute.xlu0 %569
      %v572 = vadd.f32 %v566, %v570
      %v573 = vpack.c.bf16 %v572, %v572
      %vm574 = vcmask 257024
      %575 = vst.msk [vmem:[%s316] sm:$0xf] %vm574, %v573
      %vm576 = vcmask 261120
      %v577 = vsel %vm576, %v572, 0.0
      %578 = vadd.xlane.f32.xlu0 %v577
      %v579 = vpop.xlane.xlu0 %578
      %v580 = vadd.f32 %v579, 0.0
      %v581 = vmul.f32 %v572, %v572
      %v582 = vsel %vm576, %v581, 0.0
      %583 = vadd.xlane.f32.xlu0 %v582
      %v584 = vpop.xlane.xlu0 %583
      %v585 = vadd.f32 %v584, 0.0
      %586 = vst.msk [vmem:[%s320] sm:$0xff] %vm422, %v580
      %587 = vst.msk [vmem:[%s324] sm:$0xff] %vm422, %v585
      %p588 = scmp.lt.s32.totalorder %s20, 1
      %s589 = scalar_select %p588, %s20, 1
      %s590 = smul.addr %s589, 4
      %s591 = scalar_lea.vmem %s6, %s590
      %p592 = scmp.lt.s32.totalorder %s20, 1
      %s593 = scalar_select %p592, %s20, 1
      %s594 = smul.addr %s593, 8
      %s595 = scalar_lea.vmem %s7, %s594
      %p596 = scmp.lt.s32.totalorder %s20, 1
      %s597 = scalar_select %p596, %s20, 1
      %s598 = smul.addr %s597, 8
      %s599 = scalar_lea.vmem %s8, %s598
      // Predicated region
      $region45: #{_forward.4} parent=43 // pred_check
        %p600 = pneg %p169
      $region46: #{_forward.4} parent=43 // pred_check_branch
        %602 = sbr.rel (%p600) target = $region48
      $region47: #{_forward.4} parent=43 // pred_region
        _
      $region48: #{_forward.4} parent=43 // pred_fallthru
        _
      // Predicated region
      $region49: #{_forward.4} parent=43 // pred_check
        %p603 = pneg %p195
      $region50: #{_forward.4} parent=43 // pred_check_branch
        %605 = sbr.rel (%p603) target = $region52
      $region51: #{_forward.4} parent=43 // pred_region
        _
      $region52: #{_forward.4} parent=43 // pred_fallthru
        _
      // Predicated region
      $region53: #{_forward.4} parent=43 // pred_check
        %p606 = pneg %p221
      $region54: #{_forward.4} parent=43 // pred_check_branch
        %608 = sbr.rel (%p606) target = $region56
      $region55: #{_forward.4} parent=43 // pred_region
        _
      $region56: #{_forward.4} parent=43 // pred_fallthru
        _
    $region44: #{_forward.4} parent=5 // pred_fallthru
      _
    %p609 = scmp.le.s32.totalorder 2, %s15
    // Predicated region
    $region57: #{_forward.4} parent=5 // pred_check
      %p610 = pneg %p609
    $region58: #{_forward.4} parent=5 // pred_check_branch
      %612 = sbr.rel (%p610) target = $region60
    $region59: #{_forward.4} parent=5 // pred_region
      %s613 = ssub.s32 %s15, 2
      // Predicated region
      $region61: #{_forward.4} parent=59 // pred_check
        %p614 = pneg %p175
      $region62: #{_forward.4} parent=59 // pred_check_branch
        %616 = sbr.rel (%p614) target = $region64
      $region63: #{_forward.4} parent=59 // pred_region
        %p617 = scmp.lt.s32.totalorder %s21, 1
        %s618 = scalar_select %p617, %s21, 1
        %s619 = smul.addr %s618, 4
        %s620 = scalar_lea.vmem %s6, %s619
      $region64: #{_forward.4} parent=59 // pred_fallthru
        _
      // Predicated region
      $region65: #{_forward.4} parent=59 // pred_check
        %p621 = pneg %p201
      $region66: #{_forward.4} parent=59 // pred_check_branch
        %623 = sbr.rel (%p621) target = $region68
      $region67: #{_forward.4} parent=59 // pred_region
        %p624 = scmp.lt.s32.totalorder %s21, 1
        %s625 = scalar_select %p624, %s21, 1
        %s626 = smul.addr %s625, 8
        %s627 = scalar_lea.vmem %s7, %s626
      $region68: #{_forward.4} parent=59 // pred_fallthru
        _
      // Predicated region
      $region69: #{_forward.4} parent=59 // pred_check
        %p628 = pneg %p227
      $region70: #{_forward.4} parent=59 // pred_check_branch
        %630 = sbr.rel (%p628) target = $region72
      $region71: #{_forward.4} parent=59 // pred_region
        %p631 = scmp.lt.s32.totalorder %s21, 1
        %s632 = scalar_select %p631, %s21, 1
        %s633 = smul.addr %s632, 8
        %s634 = scalar_lea.vmem %s8, %s633
      $region72: #{_forward.4} parent=59 // pred_fallthru
        _
    $region60: #{_forward.4} parent=5 // pred_fallthru
      _
  $region6: #{_forward.4} parent=0 // loop_footer
    %s19 = sadd.s32 1, %s15
  $region7: #{_forward.4} parent=0 // loop_footer_branch
    %14 = sbr.rel target = $region3
  $region8: #{_forward.4} parent=0 // loop_exit
    _

// kernel: _forward.5
$region0: #{_forward.5}
  #allocation0 [shape = 'u32[]', space=smem, size = 0x4, offset = 0x4, fixed_abs, tag = 'smem constant byte address 0x4 - core index']
  #allocation1 [shape = 'u32[144,128]{1,0:T(1,128)}', space=vmem, size = 0x12000, scoped, tag = 'internal scratch']
  %s0 = inlined_call_operand.vmem [shape: bf16[2,8,32], index: 0, kind: input, shape index: {}]
  %s1 = inlined_call_operand.vmem [shape: f32[8,1], index: 1, kind: input, shape index: {}]
  %s2 = inlined_call_operand.vmem [shape: f32[8,1], index: 2, kind: input, shape index: {}]
  %s3 = inlined_call_operand.vmem [shape: bf16[32,64], index: 3, kind: input, shape index: {}]
  %s4 = inlined_call_operand.vmem [shape: bf16[3,2,8], index: 4, kind: input, shape index: {}]
  %s5 = inlined_call_operand.vmem [shape: f32[2,1], index: 5, kind: input, shape index: {}]
  %s6 = inlined_call_operand.hbm [shape: f32[2,2,64], index: 6, kind: output, shape index: {}]
  %s7 = sld [smem:[#allocation0]]
  $region57: #{_forward.5} parent=0
    _
  %s9 = ssub.s32 1, %s7
  %s10 = scalar_select 0, %s9, %s7
  $region1: #{_forward.5} parent=0
    #allocation2 [shape = 'u8[2048]{0}', space=vmem, size = 0x800, scoped, tag = 'output window, operand 0']
    #allocation3 [shape = 's32[2]{0}', space=sflag, size = 0x8, scoped, tag = 'scoped memory for _forward.5']
    %11 = vsyncpa [#allocation3], 0
    %s12 = scalar_lea.sflag [#allocation3], 1
    %13 = vsyncpa %s12, 0
    loop: start=0, step=1, limit=4
    $region2: #{_forward.5} parent=1 // loop_pre_header
      _
    $region3: #{_forward.5} parent=1 // loop_header
      %s15 = sphi 0, %s19
      %p16 = scmp.ge.s32.totalorder %s15, 4
      %s25 = sphi 0, %s27
      %s28 = sphi 0, %s25
      %s29 = sphi 0, %s28
      %s45 = sphi 0, %s29
      %s49 = sphi 0, %s49
      %s51 = sphi 0, %s49
      %s52 = sphi 0, %s51
      %s66 = sphi 0, %s52
      %s70 = sphi 0, %s70
      %s72 = sphi 0, %s70
      %s73 = sphi 0, %s72
      %s87 = sphi 0, %s73
      %s91 = sphi 0, %s91
      %s93 = sphi 0, %s91
      %s94 = sphi 0, %s93
      %s108 = sphi 0, %s94
      %s112 = sphi 0, %s112
      %s114 = sphi 0, %s112
      %s115 = sphi 0, %s114
      %s129 = sphi 0, %s115
      %s133 = sphi 0, %s133
      %s135 = sphi 0, %s133
      %s136 = sphi 0, %s135
      %s150 = sphi 0, %s136
      %s156 = sphi 0, %s158
      %s159 = sphi 0, %s156
      %s160 = sphi 0, %s159
      %s176 = sphi 0, %s160
    $region4: #{_forward.5} parent=1 // loop_header_branch
      %18 = sbr.rel (%p16) target = $region8
    $region5: #{_forward.5} parent=1 // loop_body
      %s20 = ssub.s32 %s15, 1
      %s21 = ssub.s32 %s15, 2
      %s22 = sadd.s32 %s15, 1
      %s23 = ssub.s32 %s15, %s22
      %p24 = scmp.eq.s32.totalorder %s23, 0
      %s26 = sadd.s32 %s25, 1
      %s27 = scalar_select %p24, %s25, %s26
      %p30 = pneg %p24
      %p31 = scmp.eq.s32.totalorder %s15, 1
      %p32 = por %p30, %p31
      %p33 = scmp.ne.s32.totalorder %s25, %s28
      %p34 = scmp.eq.s32.totalorder %s15, 0
      %p35 = por %p33, %p34
      %p36 = scmp.ne.s32.totalorder %s25, %s28
      %p37 = scmp.eq.s32.totalorder %s20, 1
      %p38 = por %p36, %p37
      %p39 = scmp.ne.s32.totalorder %s28, %s29
      %p40 = scmp.eq.s32.totalorder %s20, 0
      %p41 = por %p39, %p40
      %p42 = scmp.ne.s32.totalorder %s28, %s29
      %p43 = scmp.eq.s32.totalorder %s21, 1
      %p44 = por %p42, %p43
      %p46 = scmp.ne.s32.totalorder %s29, %s45
      %p47 = scmp.eq.s32.totalorder %s21, 0
      %p48 = por %p46, %p47
      %s50 = sadd.s32 %s49, 1
      %p53 = scmp.eq.s32.totalorder %s15, 1
      %p54 = scmp.ne.s32.totalorder %s49, %s51
      %p55 = scmp.eq.s32.totalorder %s15, 0
      %p56 = por %p54, %p55
      %p57 = scmp.ne.s32.totalorder %s49, %s51
      %p58 = scmp.eq.s32.totalorder %s20, 1
      %p59 = por %p57, %p58
      %p60 = scmp.ne.s32.totalorder %s51, %s52
      %p61 = scmp.eq.s32.totalorder %s20, 0
      %p62 = por %p60, %p61
      %p63 = scmp.ne.s32.totalorder %s51, %s52
      %p64 = scmp.eq.s32.totalorder %s21, 1
      %p65 = por %p63, %p64
      %p67 = scmp.ne.s32.totalorder %s52, %s66
      %p68 = scmp.eq.s32.totalorder %s21, 0
      %p69 = por %p67, %p68
      %s71 = sadd.s32 %s70, 1
      %p74 = scmp.eq.s32.totalorder %s15, 1
      %p75 = scmp.ne.s32.totalorder %s70, %s72
      %p76 = scmp.eq.s32.totalorder %s15, 0
      %p77 = por %p75, %p76
      %p78 = scmp.ne.s32.totalorder %s70, %s72
      %p79 = scmp.eq.s32.totalorder %s20, 1
      %p80 = por %p78, %p79
      %p81 = scmp.ne.s32.totalorder %s72, %s73
      %p82 = scmp.eq.s32.totalorder %s20, 0
      %p83 = por %p81, %p82
      %p84 = scmp.ne.s32.totalorder %s72, %s73
      %p85 = scmp.eq.s32.totalorder %s21, 1
      %p86 = por %p84, %p85
      %p88 = scmp.ne.s32.totalorder %s73, %s87
      %p89 = scmp.eq.s32.totalorder %s21, 0
      %p90 = por %p88, %p89
      %s92 = sadd.s32 %s91, 1
      %p95 = scmp.eq.s32.totalorder %s15, 1
      %p96 = scmp.ne.s32.totalorder %s91, %s93
      %p97 = scmp.eq.s32.totalorder %s15, 0
      %p98 = por %p96, %p97
      %p99 = scmp.ne.s32.totalorder %s91, %s93
      %p100 = scmp.eq.s32.totalorder %s20, 1
      %p101 = por %p99, %p100
      %p102 = scmp.ne.s32.totalorder %s93, %s94
      %p103 = scmp.eq.s32.totalorder %s20, 0
      %p104 = por %p102, %p103
      %p105 = scmp.ne.s32.totalorder %s93, %s94
      %p106 = scmp.eq.s32.totalorder %s21, 1
      %p107 = por %p105, %p106
      %p109 = scmp.ne.s32.totalorder %s94, %s108
      %p110 = scmp.eq.s32.totalorder %s21, 0
      %p111 = por %p109, %p110
      %s113 = sadd.s32 %s112, 1
      %p116 = scmp.eq.s32.totalorder %s15, 1
      %p117 = scmp.ne.s32.totalorder %s112, %s114
      %p118 = scmp.eq.s32.totalorder %s15, 0
      %p119 = por %p117, %p118
      %p120 = scmp.ne.s32.totalorder %s112, %s114
      %p121 = scmp.eq.s32.totalorder %s20, 1
      %p122 = por %p120, %p121
      %p123 = scmp.ne.s32.totalorder %s114, %s115
      %p124 = scmp.eq.s32.totalorder %s20, 0
      %p125 = por %p123, %p124
      %p126 = scmp.ne.s32.totalorder %s114, %s115
      %p127 = scmp.eq.s32.totalorder %s21, 1
      %p128 = por %p126, %p127
      %p130 = scmp.ne.s32.totalorder %s115, %s129
      %p131 = scmp.eq.s32.totalorder %s21, 0
      %p132 = por %p130, %p131
      %s134 = sadd.s32 %s133, 1
      %p137 = scmp.eq.s32.totalorder %s15, 1
      %p138 = scmp.ne.s32.totalorder %s133, %s135
      %p139 = scmp.eq.s32.totalorder %s15, 0
      %p140 = por %p138, %p139
      %p141 = scmp.ne.s32.totalorder %s133, %s135
      %p142 = scmp.eq.s32.totalorder %s20, 1
      %p143 = por %p141, %p142
      %p144 = scmp.ne.s32.totalorder %s135, %s136
      %p145 = scmp.eq.s32.totalorder %s20, 0
      %p146 = por %p144, %p145
      %p147 = scmp.ne.s32.totalorder %s135, %s136
      %p148 = scmp.eq.s32.totalorder %s21, 1
      %p149 = por %p147, %p148
      %p151 = scmp.ne.s32.totalorder %s136, %s150
      %p152 = scmp.eq.s32.totalorder %s21, 0
      %p153 = por %p151, %p152
      %s154 = ssub.s32 %s15, %s22
      %p155 = scmp.eq.s32.totalorder %s154, 0
      %s157 = sadd.s32 %s156, 1
      %s158 = scalar_select %p155, %s156, %s157
      %p161 = pneg %p155
      %p162 = scmp.eq.s32.totalorder %s15, 1
      %p163 = por %p161, %p162
      %p164 = scmp.ne.s32.totalorder %s156, %s159
      %p165 = scmp.eq.s32.totalorder %s15, 0
      %p166 = por %p164, %p165
      %p167 = scmp.ne.s32.totalorder %s156, %s159
      %p168 = scmp.eq.s32.totalorder %s20, 1
      %p169 = por %p167, %p168
      %p170 = scmp.ne.s32.totalorder %s159, %s160
      %p171 = scmp.eq.s32.totalorder %s20, 0
      %p172 = por %p170, %p171
      %p173 = scmp.ne.s32.totalorder %s159, %s160
      %p174 = scmp.eq.s32.totalorder %s21, 1
      %p175 = por %p173, %p174
      %p177 = scmp.ne.s32.totalorder %s160, %s176
      %p178 = scmp.eq.s32.totalorder %s21, 0
      %p179 = por %p177, %p178
      %p180 = scmp.le.s32.totalorder 1, %s15
      %p181 = scmp.lt.s32.totalorder %s15, 3
      %p182 = pnand %p180, %p181
      %p183 = pneg %p182
      // Predicated region
      $region9: #{_forward.5} parent=5 // pred_check
        _
      $region10: #{_forward.5} parent=5 // pred_check_branch
        %185 = sbr.rel (%p182) target = $region12
      $region11: #{_forward.5} parent=5 // pred_region
        %s186 = ssub.s32 %s15, 1
        // Predicated region
        $region13: #{_forward.5} parent=11 // pred_check
          %p187 = pneg %p62
        $region14: #{_forward.5} parent=11 // pred_check_branch
          %189 = sbr.rel (%p187) target = $region16
        $region15: #{_forward.5} parent=11 // pred_region
          _
        $region16: #{_forward.5} parent=11 // pred_fallthru
          _
        // Predicated region
        $region17: #{_forward.5} parent=11 // pred_check
          %p190 = pneg %p83
        $region18: #{_forward.5} parent=11 // pred_check_branch
          %192 = sbr.rel (%p190) target = $region20
        $region19: #{_forward.5} parent=11 // pred_region
          _
        $region20: #{_forward.5} parent=11 // pred_fallthru
          _
        // Predicated region
        $region21: #{_forward.5} parent=11 // pred_check
          %p193 = pneg %p104
        $region22: #{_forward.5} parent=11 // pred_check_branch
          %195 = sbr.rel (%p193) target = $region24
        $region23: #{_forward.5} parent=11 // pred_region
          _
        $region24: #{_forward.5} parent=11 // pred_fallthru
          _
        // Predicated region
        $region25: #{_forward.5} parent=11 // pred_check
          %p196 = pneg %p125
        $region26: #{_forward.5} parent=11 // pred_check_branch
          %198 = sbr.rel (%p196) target = $region28
        $region27: #{_forward.5} parent=11 // pred_region
          _
        $region28: #{_forward.5} parent=11 // pred_fallthru
          _
        // Predicated region
        $region29: #{_forward.5} parent=11 // pred_check
          %p199 = pneg %p146
        $region30: #{_forward.5} parent=11 // pred_check_branch
          %201 = sbr.rel (%p199) target = $region32
        $region31: #{_forward.5} parent=11 // pred_region
          _
        $region32: #{_forward.5} parent=11 // pred_fallthru
          _
      $region12: #{_forward.5} parent=5 // pred_fallthru
        _
      %p202 = scmp.lt.s32.totalorder %s15, 2
      // Predicated region
      $region33: #{_forward.5} parent=5 // pred_check
        %p203 = pneg %p202
      $region34: #{_forward.5} parent=5 // pred_check_branch
        %205 = sbr.rel (%p203) target = $region36
      $region35: #{_forward.5} parent=5 // pred_region
        // Predicated region
        $region37: #{_forward.5} parent=35 // pred_check
          %p206 = pneg %p35
        $region38: #{_forward.5} parent=35 // pred_check_branch
          %208 = sbr.rel (%p206) target = $region40
        $region39: #{_forward.5} parent=35 // pred_region
          %p209 = scmp.lt.s32.totalorder %s15, 1
          %s210 = scalar_select %p209, %s15, 1
          %s211 = smul.addr %s210, 4
          %s212 = scalar_lea.vmem %s0, %s211
        $region40: #{_forward.5} parent=35 // pred_fallthru
          _
      $region36: #{_forward.5} parent=5 // pred_fallthru
        _
      %p213 = scmp.le.s32.totalorder 1, %s15
      %p214 = scmp.lt.s32.totalorder %s15, 3
      %p215 = pnand %p213, %p214
      %p216 = pneg %p215
      // Predicated region
      $region41: #{_forward.5} parent=5 // pred_check
        _
      $region42: #{_forward.5} parent=5 // pred_check_branch
        %218 = sbr.rel (%p215) target = $region44
      $region43: #{_forward.5} parent=5 // pred_region
        %s219 = ssub.s32 %s15, 1
        %p220 = scmp.lt.s32.totalorder %s20, 1
        %s221 = scalar_select %p220, %s20, 1
        %s222 = smul.addr %s221, 4
        %s223 = scalar_lea.vmem %s0, %s222
        %p224 = pneg %p41
        %p225 = pneg %p38
        %p226 = pneg %p62
        %p227 = pneg %p59
        %p228 = pneg %p83
        %p229 = pneg %p80
        %p230 = pneg %p104
        %p231 = pneg %p101
        %p232 = pneg %p125
        %p233 = pneg %p122
        %p234 = pneg %p146
        %p235 = pneg %p143
        %p236 = pneg %p172
        %p237 = pneg %p169
        %s238 = sand.u32 %s159, 1
        %s239 = scalar_lea.sflag [#allocation3], %s238
        %s240 = sand.u32 %s159, 1
        %s241 = smul.addr %s240, 2
        %s242 = scalar_lea.vmem [#allocation2], %s241
        %p243 = scmp.lt.s32.totalorder %s20, 1
        %s244 = scalar_select %p243, %s20, 1
        %s245 = smul.addr %s244, 4
        %s246 = scalar_lea.vmem %s0, %s245
        %v248 = vld [vmem:[%s246] sm:$0xf]
        %v249 = vunpack.c.l.bf16 %v248
        %v250 = vld [vmem:[%s1] sm:$0xff]
        %252 = vset.pattern.permute.xlu0 0
        %253 = vperm.xlu0 %252, %v250
        %v254 = vpop.permute.xlu0 %253
        %v256 = vmul.f32 %v249, %v254
        %v257 = vld [vmem:[%s2] sm:$0xff]
        %259 = vset.pattern.permute.xlu0 0
        %260 = vperm.xlu0 %259, %v257
        %v261 = vpop.permute.xlu0 %260
        %v263 = vadd.f32 %v256, %v261
        %vm264 = vcmp.ge.f32.partialorder %v263, 0.0
        %v265 = vmul.f32 %v263, 0.2
        %v266 = vsel %vm264, %v263, %v265
        %v267 = vpack.c.bf16 %v266, %v266
        %v268 = vld [vmem:[%s3] sm:$0xf]
        %v269 = vld [vmem:[%s3 + $0x4] sm:$0xf]
        %v270 = vld [vmem:[%s3 + $0x8] sm:$0xf]
        %v271 = vld [vmem:[%s3 + $0xc] sm:$0xf]
        %v276 = vunpack.c.l.b16 %v268
        %v277 = vunpack.c.l.b16 %v269
        %v278 = vunpack.c.l.b16 %v270
        %v279 = vunpack.c.l.b16 %v271
        %v280 = vpack.c.b16 %v277, %v276
        %v281 = vpack.c.b16 %v279, %v278
        %vm284 = vcmask 261120
        %v286 = vsel %vm284, %v267, 0
        %288 = vmatprep.subr.bf16.mxu0 0
        %289 = vmatpush1.bf16.msra.mxu0 %v280
        %290 = vmatprep.subr.bf16.mxu0 0
        %291 = vmatpush1.bf16.msra.mxu0 %v281
        %292 = vmatprep.subr.bf16.mxu0 0
        %293 = vmatpush1.bf16.msra.mxu0 0
        %294 = vmatprep.subr.bf16.mxu0 0
        %295 = vmatpush1.bf16.msra.mxu0 0
        %296 = vmatprep.subr.bf16.mxu0 0
        %297 = vmatpush1.bf16.msra.mxu0 0
        %298 = vmatprep.subr.bf16.mxu0 0
        %299 = vmatpush1.bf16.msra.mxu0 0
        %300 = vmatprep.subr.bf16.mxu0 0
        %301 = vmatpush1.bf16.msra.mxu0 0
        %302 = vmatprep.subr.bf16.mxu0 0
        %303 = vmatpush1.bf16.msra.mxu0 0
        %304 = vmatprep.subr.bf16.mxu0 0
        %305 = vmatpush1.bf16.msra.mxu0 0
        %306 = vmatprep.subr.bf16.mxu0 0
        %307 = vmatpush1.bf16.msra.mxu0 0
        %308 = vmatprep.subr.bf16.mxu0 0
        %309 = vmatpush1.bf16.msra.mxu0 0
        %310 = vmatprep.subr.bf16.mxu0 0
        %311 = vmatpush1.bf16.msra.mxu0 0
        %312 = vmatprep.subr.bf16.mxu0 0
        %313 = vmatpush1.bf16.msra.mxu0 0
        %314 = vmatprep.subr.bf16.mxu0 0
        %315 = vmatpush1.bf16.msra.mxu0 0
        %316 = vmatprep.subr.bf16.mxu0 0
        %317 = vmatpush1.bf16.msra.mxu0 0
        %318 = vmatprep.subr.bf16.mxu0 0
        %319 = vmatpush1.bf16.msra.mxu0 0
        %320 = vmatprep.mubr.bf16.mxu0 0
        %321 = vmatmul.mubr.bf16.gmra.mrb[0].mxu0 %v286
        %v322 = vpop.f32.mrb[0].mxu0
        %v323 = vadd.f32 0.0, %v322
        %v324 = vpop.f32.mrb[0].mxu0
        %v325 = vpop.f32.mrb[0].mxu0
        %v326 = vpop.f32.mrb[0].mxu0
        %327 = vdwg.mxu0
        %v328 = vpack.c.bf16 %v323, %v323
        %330 = vrot.lane.b32.xlu0 %v328, 1
        %v331 = vpop.permute.xlu0 %330
        %vm332 = vcmask 7168
        %v335 = vsel %vm332, 0, %v331
        %336 = vrot.lane.b32.xlu0 %v328, 127
        %v337 = vpop.permute.xlu0 %336
        %vm338 = vcmask 515072
        %v340 = vsel %vm338, %v337, 0
        %v341 = vld [vmem:[%s4] sm:$0x1]
        %v342 = vld [vmem:[%s4 + $0x1] sm:$0x1]
        %v343 = vld [vmem:[%s4 + $0x2] sm:$0x1]
        %v344 = vld [vmem:[%s5] sm:$0x3]
        %vm345 = vcmask 64512
        %v347 = vsel %vm345, %v342, 0
        %vm349 = vcmask 1043456
        %v351 = vsel %vm349, %v328, 0
        %353 = vmatprep.subr.bf16.mxu0 0
        %354 = vmatpush1.bf16.msra.mxu0 %v351
        %355 = vmatprep.subr.bf16.mxu0 0
        %356 = vmatpush1.bf16.msra.mxu0 0
        %357 = vmatprep.subr.bf16.mxu0 0
        %358 = vmatpush1.bf16.msra.mxu0 0
        %359 = vmatprep.subr.bf16.mxu0 0
        %360 = vmatpush1.bf16.msra.mxu0 0
        %361 = vmatprep.subr.bf16.mxu0 0
        %362 = vmatpush1.bf16.msra.mxu0 0
        %363 = vmatprep.subr.bf16.mxu0 0
        %364 = vmatpush1.bf16.msra.mxu0 0
        %365 = vmatprep.subr.bf16.mxu0 0
        %366 = vmatpush1.bf16.msra.mxu0 0
        %367 = vmatprep.subr.bf16.mxu0 0
        %368 = vmatpush1.bf16.msra.mxu0 0
        %369 = vmatprep.subr.bf16.mxu0 0
        %370 = vmatpush1.bf16.msra.mxu0 0
        %371 = vmatprep.subr.bf16.mxu0 0
        %372 = vmatpush1.bf16.msra.mxu0 0
        %373 = vmatprep.subr.bf16.mxu0 0
        %374 = vmatpush1.bf16.msra.mxu0 0
        %375 = vmatprep.subr.bf16.mxu0 0
        %376 = vmatpush1.bf16.msra.mxu0 0
        %377 = vmatprep.subr.bf16.mxu0 0
        %378 = vmatpush1.bf16.msra.mxu0 0
        %379 = vmatprep.subr.bf16.mxu0 0
        %380 = vmatpush1.bf16.msra.mxu0 0
        %381 = vmatprep.subr.bf16.mxu0 0
        %382 = vmatpush1.bf16.msra.mxu0 0
        %383 = vmatprep.subr.bf16.mxu0 0
        %384 = vmatpush1.bf16.msra.mxu0 0
        %385 = vmatprep.mubr.bf16.mxu0 0
        %386 = vmatmul.mubr.bf16.gmra.mrb[0].mxu0 %v347
        %v387 = vpop.f32.mrb[0].mxu0
        %v388 = vadd.f32 0.0, %v387
        %v389 = vpop.f32.mrb[0].mxu0
        %v390 = vpop.f32.mrb[0].mxu0
        %v391 = vpop.f32.mrb[0].mxu0
        %392 = vdwg.mxu0
        %v394 = vsel %vm345, %v341, 0
        %v396 = vsel %vm349, %v335, 0
        %398 = vmatprep.subr.bf16.mxu0 0
        %399 = vmatpush1.bf16.msra.mxu0 %v396
        %400 = vmatprep.subr.bf16.mxu0 0
        %401 = vmatpush1.bf16.msra.mxu0 0
        %402 = vmatprep.subr.bf16.mxu0 0
        %403 = vmatpush1.bf16.msra.mxu0 0
        %404 = vmatprep.subr.bf16.mxu0 0
        %405 = vmatpush1.bf16.msra.mxu0 0
        %406 = vmatprep.subr.bf16.mxu0 0
        %407 = vmatpush1.bf16.msra.mxu0 0
        %408 = vmatprep.subr.bf16.mxu0 0
        %409 = vmatpush1.bf16.msra.mxu0 0
        %410 = vmatprep.subr.bf16.mxu0 0
        %411 = vmatpush1.bf16.msra.mxu0 0
        %412 = vmatprep.subr.bf16.mxu0 0
        %413 = vmatpush1.bf16.msra.mxu0 0
        %414 = vmatprep.subr.bf16.mxu0 0
        %415 = vmatpush1.bf16.msra.mxu0 0
        %416 = vmatprep.subr.bf16.mxu0 0
        %417 = vmatpush1.bf16.msra.mxu0 0
        %418 = vmatprep.subr.bf16.mxu0 0
        %419 = vmatpush1.bf16.msra.mxu0 0
        %420 = vmatprep.subr.bf16.mxu0 0
        %421 = vmatpush1.bf16.msra.mxu0 0
        %422 = vmatprep.subr.bf16.mxu0 0
        %423 = vmatpush1.bf16.msra.mxu0 0
        %424 = vmatprep.subr.bf16.mxu0 0
        %425 = vmatpush1.bf16.msra.mxu0 0
        %426 = vmatprep.subr.bf16.mxu0 0
        %427 = vmatpush1.bf16.msra.mxu0 0
        %428 = vmatprep.subr.bf16.mxu0 0
        %429 = vmatpush1.bf16.msra.mxu0 0
        %430 = vmatprep.mubr.bf16.mxu0 0
        %431 = vmatmul.mubr.bf16.gmra.mrb[0].mxu0 %v394
        %v432 = vpop.f32.mrb[0].mxu0
        %v433 = vadd.f32 %v388, %v432
        %v434 = vpop.f32.mrb[0].mxu0
        %v435 = vpop.f32.mrb[0].mxu0
        %v436 = vpop.f32.mrb[0].mxu0
        %437 = vdwg.mxu0
        %v439 = vsel %vm345, %v343, 0
        %v441 = vsel %vm349, %v340, 0
        %443 = vmatprep.subr.bf16.mxu0 0
        %444 = vmatpush1.bf16.msra.mxu0 %v441
        %445 = vmatprep.subr.bf16.mxu0 0
        %446 = vmatpush1.bf16.msra.mxu0 0
        %447 = vmatprep.subr.bf16.mxu0 0
        %448 = vmatpush1.bf16.msra.mxu0 0
        %449 = vmatprep.subr.bf16.mxu0 0
        %450 = vmatpush1.bf16.msra.mxu0 0
        %451 = vmatprep.subr.bf16.mxu0 0
        %452 = vmatpush1.bf16.msra.mxu0 0
        %453 = vmatprep.subr.bf16.mxu0 0
        %454 = vmatpush1.bf16.msra.mxu0 0
        %455 = vmatprep.subr.bf16.mxu0 0
        %456 = vmatpush1.bf16.msra.mxu0 0
        %457 = vmatprep.subr.bf16.mxu0 0
        %458 = vmatpush1.bf16.msra.mxu0 0
        %459 = vmatprep.subr.bf16.mxu0 0
        %460 = vmatpush1.bf16.msra.mxu0 0
        %461 = vmatprep.subr.bf16.mxu0 0
        %462 = vmatpush1.bf16.msra.mxu0 0
        %463 = vmatprep.subr.bf16.mxu0 0
        %464 = vmatpush1.bf16.msra.mxu0 0
        %465 = vmatprep.subr.bf16.mxu0 0
        %466 = vmatpush1.bf16.msra.mxu0 0
        %467 = vmatprep.subr.bf16.mxu0 0
        %468 = vmatpush1.bf16.msra.mxu0 0
        %469 = vmatprep.subr.bf16.mxu0 0
        %470 = vmatpush1.bf16.msra.mxu0 0
        %471 = vmatprep.subr.bf16.mxu0 0
        %472 = vmatpush1.bf16.msra.mxu0 0
        %473 = vmatprep.subr.bf16.mxu0 0
        %474 = vmatpush1.bf16.msra.mxu0 0
        %475 = vmatprep.mubr.bf16.mxu0 0
        %476 = vmatmul.mubr.bf16.gmra.mrb[0].mxu0 %v439
        %v477 = vpop.f32.mrb[0].mxu0
        %v478 = vadd.f32 0.0, %v477
        %v479 = vpop.f32.mrb[0].mxu0
        %v480 = vpop.f32.mrb[0].mxu0
        %v481 = vpop.f32.mrb[0].mxu0
        %482 = vdwg.mxu0
        %v483 = vadd.f32 %v433, %v478
        %485 = vset.pattern.permute.xlu0 0
        %486 = vperm.xlu0 %485, %v344
        %v487 = vpop.permute.xlu0 %486
        %v489 = vadd.f32 %v483, %v487
        %vm490 = vcmask 517120
        %491 = vst.msk [vmem:[%s242] sm:$0x3] %vm490, %v489
        %s492 = sand.u32 %s159, 1
        %s493 = scalar_lea.sflag [#allocation3], %s492
        %s494 = sand.u32 %s159, 1
        %s495 = smul.addr %s494, 2
        %s496 = scalar_lea.vmem [#allocation2], %s495
        // Predicated region
        $region45: #{_forward.5} parent=43 // pred_check
          %p497 = pneg %p169
        $region46: #{_forward.5} parent=43 // pred_check_branch
          %499 = sbr.rel (%p497) target = $region48
        $region47: #{_forward.5} parent=43 // pred_region
          %s501 = ssub.s32 32, 32
          %502 = vsyncadd %s493, %s501
          %s503 = smul.addr %s20, 32
          %s504 = scalar_lea.hbm %s6, %s503
          %s506 = sshll.u32 %s496, 4
          %s507 = int_to_ptr.vmem [resolvable:$true] %s506
          %509 = dma.vmem_to_hbm [thread:$0]  %s507, 32, %s504, %s493
        $region48: #{_forward.5} parent=43 // pred_fallthru
          _
      $region44: #{_forward.5} parent=5 // pred_fallthru
        _
      %p510 = scmp.le.s32.totalorder 2, %s15
      // Predicated region
      $region49: #{_forward.5} parent=5 // pred_check
        %p511 = pneg %p510
      $region50: #{_forward.5} parent=5 // pred_check_branch
        %513 = sbr.rel (%p511) target = $region52
      $region51: #{_forward.5} parent=5 // pred_region
        %s514 = ssub.s32 %s15, 2
        // Predicated region
        $region53: #{_forward.5} parent=51 // pred_check
          %p515 = pneg %p175
        $region54: #{_forward.5} parent=51 // pred_check_branch
          %517 = sbr.rel (%p515) target = $region56
        $region55: #{_forward.5} parent=51 // pred_region
          %s518 = sand.u32 %s160, 1
          %s519 = scalar_lea.sflag [#allocation3], %s518
          %s520 = sand.u32 %s160, 1
          %s521 = smul.addr %s520, 2
          %s522 = scalar_lea.vmem [#allocation2], %s521
          %523 = dma.done %s519, 32
        $region56: #{_forward.5} parent=51 // pred_fallthru
          _
      $region52: #{_forward.5} parent=5 // pred_fallthru
        _
    $region6: #{_forward.5} parent=1 // loop_footer
      %s19 = sadd.s32 1, %s15
    $region7: #{_forward.5} parent=1 // loop_footer_branch
      %14 = sbr.rel target = $region3
    $region8: #{_forward.5} parent=1 // loop_exit
      _
    %524 = vsyncpa [#allocation3], 1
    %s525 = scalar_lea.sflag [#allocation3], 1
    %526 = vsyncpa %s525, 1

</llo_original>
